<compile_context>
chip_gen: v6e
topology: v6e:2x2x1
jax: 0.10.0
libtpu: 0.0.40
codegen_flags: <defaults>
</compile_context>

<pallas_src>
import jax
import jax.numpy as jnp
from jax.experimental import pallas as pl
from jax.experimental.pallas import tpu as pltpu

EPS = 1e-5  # matches torch layer_norm / BatchNorm1d default eps


# ----------------------------------------------------------------------------
# Fused forward kernel: layer_norm(last 2 dims) -> HB layers -> head -> softmax
# ----------------------------------------------------------------------------
def make_fused_kernel(dims, wmeta, vmeta):
    """dims: list of (n_prev, T_prev, n_i, T_i); wmeta/vmeta: static slab layout."""

    def kernel(x_ref, w_ref, v_ref, out_ref):
        # ---- static slab carving (one DMA per slab, many views) -------------
        def W(name):                       # 2-D weight, exact shape
            off, r, c = wmeta[name]
            return w_ref[off:off + r, 0:c]

        def V(name):                       # 1-D bias / BN param as (1, n)
            row, n = vmeta[name]
            return v_ref[row:row + 1, 0:n]

        x = x_ref[...].astype(jnp.float32)                  # (B, T0, N0)
        B, T0, N0 = x.shape

        # ---- nn.functional.layer_norm over the last TWO dims (per sample) ---
        inv = 1.0 / float(T0 * N0)
        mu = jnp.sum(jnp.sum(x, axis=2, keepdims=True), axis=1, keepdims=True) * inv
        xc = x - mu
        var = jnp.sum(jnp.sum(xc * xc, axis=2, keepdims=True),
                      axis=1, keepdims=True) * inv
        x = xc * jax.lax.rsqrt(var + EPS)

        # ---- HB layer stand-ins: time proj -> node proj -> LN over nodes ----
        # All matmuls are 2-D with batch folded into M (no weight broadcast,
        # no batched MXU passes).  Reshapes only merge/split leading dims whose
        # second-minor size is a multiple of 8 (layout no-ops).
        for i, (n_prev, t_prev, n_i, t_i) in enumerate(dims):
            wtT = W(f"wt{i}")                                # (t_prev, t_i), pre-transposed
            wn = W(f"wn{i}")                                 # (n_prev, n_i)

            xT = jnp.transpose(x, (0, 2, 1))                 # (B, n_prev, t_prev)
            y2 = jnp.dot(xT.reshape(B * n_prev, t_prev), wtT,
                         preferred_element_type=jnp.float32)  # (B*n_prev, t_i)
            y = jnp.transpose(y2.reshape(B, n_prev, t_i), (0, 2, 1))  # (B, t_i, n_prev)

            z2 = jnp.dot(y.reshape(B * t_i, n_prev), wn,
                         preferred_element_type=jnp.float32)  # (B*t_i, n_i)
            z = z2.reshape(B, t_i, n_i)                       # (B, t_i, n_i)

            mu_z = jnp.mean(z, axis=-1, keepdims=True)        # LN over node dim
            var_z = jnp.mean((z - mu_z) ** 2, axis=-1, keepdims=True)
            x = (z - mu_z) * jax.lax.rsqrt(var_z + EPS)

        # ---- fea = x.permute(0, 2, 1): one tiny 8-aligned XLU transpose ------
        fea = jnp.transpose(x, (0, 2, 1))                     # (B, Nf, T_out)
        Nf = fea.shape[1]

        # ---- head: dim_reduction1 (Linear(T_out, Th) + ReLU) per node, ------
        # built directly in torch row-major flatten order, then ONE matmul
        # for Linear(Nf*Th, 30).  No 4-D broadcasts, no minor-dim reshapes.
        w1 = W("w1")                                          # (T_out, Th)
        b1 = V("b1")                                          # (1, Th)
        parts = []
        for n in range(Nf):                                   # static unroll, Nf=8
            f_n = fea[:, n, :]                                # (B, T_out)
            parts.append(jnp.maximum(
                jnp.dot(f_n, w1, preferred_element_type=jnp.float32) + b1, 0.0))
        h1_flat = jnp.concatenate(parts, axis=-1)             # (B, Nf*Th)

        h2 = jnp.dot(h1_flat, W("w2"),
                     preferred_element_type=jnp.float32) + V("b2")   # (B, 30)

        # ---- Linear -> BN(batch stats, train mode) -> ReLU, twice, -> Linear -
        def bn_relu(v, g, b):
            mu_v = jnp.mean(v, axis=0, keepdims=True)
            var_v = jnp.mean((v - mu_v) ** 2, axis=0, keepdims=True)
            return jnp.maximum((v - mu_v) * jax.lax.rsqrt(var_v + EPS) * g + b, 0.0)

        h2 = bn_relu(h2, V("g2"), V("be2"))
        h3 = jnp.dot(h2, W("w3"), preferred_element_type=jnp.float32) + V("b3")
        h3 = bn_relu(h3, V("g3"), V("be3"))
        logits = jnp.dot(h3, W("w4"), preferred_element_type=jnp.float32) + V("b4")

        # ---- Softmax(dim=-1): one reciprocal (exact) + multiply --------------
        logits = logits - jnp.max(logits, axis=-1, keepdims=True)
        e = jnp.exp(logits)
        s = jnp.sum(e, axis=-1, keepdims=True)
        out_ref[...] = (e * pl.reciprocal(s, approx=False)).astype(out_ref.dtype)

    return kernel


# ----------------------------------------------------------------------------
# Config + deterministic synthetic parameters, packed into two VMEM slabs
# ----------------------------------------------------------------------------
class Config:
    layer = 2
    norm_num = 32      # initial node count (kept 8-aligned through all layers)
    input_size = 32    # initial T (kept 8-aligned through all layers)
    T_out = 16         # (88 in the original; scaled down for a small test)
    output_size = 4
    ratio = 0.5


def layer_dims(cfg):
    dims = []
    new_n, T = cfg.norm_num, cfg.input_size
    for i in range(cfg.layer):
        new_n1, T_1 = new_n, T
        new_n = int(cfg.ratio * new_n)
        T = int(T - (cfg.input_size - cfg.T_out) / cfg.layer)
        T_i = cfg.T_out if i == cfg.layer - 1 else T
        dims.append((new_n1, T_1, new_n, T_i))
    return dims, new_n


def _pad8(r):
    return ((r + 7) // 8) * 8


def init_params(key, cfg):
    dims, n_final = layer_dims(cfg)
    Th = cfg.T_out // 2
    keys = jax.random.split(key, 2 * cfg.layer + 4)
    ki = 0

    # ---- 2-D weights (stored in the orientation the kernel consumes) --------
    wblocks = {}
    for i, (n1, T1, nn_, Ti) in enumerate(dims):
        # time projection, pre-transposed to (T_prev, T_i)
        wblocks[f"wt{i}"] = (jax.random.normal(keys[ki], (T1, Ti), jnp.float32)
                             / float(T1) ** 0.5); ki += 1
        wblocks[f"wn{i}"] = (jax.random.normal(keys[ki], (n1, nn_), jnp.float32)
                             / float(n1) ** 0.5); ki += 1
    wblocks["w1"] = (jax.random.normal(keys[ki], (cfg.T_out, Th), jnp.float32)
                     / float(cfg.T_out) ** 0.5); ki += 1
    wblocks["w2"] = (jax.random.normal(keys[ki], (n_final * Th, 30), jnp.float32)
                     / float(n_final * Th) ** 0.5); ki += 1
    wblocks["w3"] = (jax.random.normal(keys[ki], (30, 16), jnp.float32)
                     / 30.0 ** 0.5); ki += 1
    wblocks["w4"] = (jax.random.normal(keys[ki], (16, cfg.output_size), jnp.float32)
                     / 16.0 ** 0.5); ki += 1

    # Pack every 2-D weight into one lane-dense (rows, 128) f32 slab.
    wmeta, rows, off = {}, [], 0
    for name, w in wblocks.items():
        r, c = w.shape
        rp = _pad8(r)
        rows.append(jnp.zeros((rp, 128), jnp.float32).at[:r, :c].set(w))
        wmeta[name] = (off, r, c)
        off += rp
    w_slab = jnp.concatenate(rows, axis=0)                     # (232, 128)

    # Pack every bias / BatchNorm affine param into one (8, 128) tile.
    vblocks = {
        "b1": jnp.zeros((Th,), jnp.float32),
        "b2": jnp.zeros((30,), jnp.float32),
        "g2": jnp.ones((30,), jnp.float32),
        "be2": jnp.zeros((30,), jnp.float32),
        "b3": jnp.zeros((16,), jnp.float32),
        "g3": jnp.ones((16,), jnp.float32),
        "be3": jnp.zeros((16,), jnp.float32),
        "b4": jnp.zeros((cfg.output_size,), jnp.float32),
    }
    vmeta, vrows = {}, []
    for r, (name, v) in enumerate(vblocks.items()):
        vmeta[name] = (r, v.shape[0])
        vrows.append(jnp.zeros((1, 128), jnp.float32).at[0, :v.shape[0]].set(v))
    v_slab = jnp.concatenate(vrows, axis=0)                    # (8, 128)

    return {"w_slab": w_slab, "v_slab": v_slab,
            "wmeta": wmeta, "vmeta": vmeta, "dims": dims}


# ----------------------------------------------------------------------------
# Full forward (mirrors HBGinTransformer.forward, order='11') — ONE pallas_call
# ----------------------------------------------------------------------------
def forward(params, x, cfg):
    B = x.shape[0]
    vmem = pl.BlockSpec(memory_space=pltpu.MemorySpace.VMEM)
    outputs = pl.pallas_call(
        make_fused_kernel(params["dims"], params["wmeta"], params["vmeta"]),
        out_shape=jax.ShapeDtypeStruct((B, cfg.output_size), jnp.float32),
        in_specs=[vmem, vmem, vmem],          # x + 2 packed slabs: 3 DMAs total
        out_specs=vmem,
    )(x, params["w_slab"], params["v_slab"])
    # TODO(synk): DEC losses (loss1..loss4) are not reproducible without dec.DEC;
    # the stand-in per-layer losses are 0, so loss = sum(losss)/layer == 0.
    loss = jnp.float32(0.0)
    return outputs, loss


if __name__ == "__main__":
    cfg = Config()
    key = jax.random.PRNGKey(0)
    k_x, k_p = jax.random.split(key)
    B = 2
    x = jax.random.normal(k_x, (B, cfg.input_size, cfg.norm_num), jnp.float32)
    params = init_params(k_p, cfg)

    outputs, loss = forward(params, x, cfg)
    jax.block_until_ready(outputs)
    jax.block_until_ready(loss)

    assert outputs.shape == (B, cfg.output_size)
    assert bool(jnp.all(jnp.abs(jnp.sum(outputs, axis=-1) - 1.0) < 1e-4))
    assert bool(jnp.all(jnp.isfinite(outputs)))
    print("KERNEL_OK")
</pallas_src>

<mosaic_0001>
module attributes {stable_mosaic.version = 11 : i64} {
  func.func @kernel(%arg0: memref<2x32x32xf32, #tpu.memory_space<vmem>>, %arg1: memref<232x128xf32, #tpu.memory_space<vmem>>, %arg2: memref<8x128xf32, #tpu.memory_space<vmem>>, %arg3: memref<2x4xf32, #tpu.memory_space<vmem>>) attributes {dimension_semantics = [], scalar_prefetch = 0 : i64, scratch_operands = 0 : i64, tpu.core_type = #tpu.core_type<tc>} {
    %c0 = arith.constant 0 : index
    %c0_0 = arith.constant 0 : index
    %c0_1 = arith.constant 0 : index
    %0 = vector.load %arg0[%c0, %c0_0, %c0_1] : memref<2x32x32xf32, #tpu.memory_space<vmem>>, vector<2x32x32xf32>
    %cst = arith.constant dense<0.000000e+00> : vector<2x32xf32>
    %1 = vector.multi_reduction <add>, %0, %cst [2] : vector<2x32x32xf32> to vector<2x32xf32>
    %2 = vector.shape_cast %1 : vector<2x32xf32> to vector<2x32x1xf32>
    %cst_2 = arith.constant dense<0.000000e+00> : vector<2x1xf32>
    %3 = vector.multi_reduction <add>, %2, %cst_2 [1] : vector<2x32x1xf32> to vector<2x1xf32>
    %4 = vector.shape_cast %3 : vector<2x1xf32> to vector<2x1x1xf32>
    %cst_3 = arith.constant 9.765625E-4 : f32
    %5 = vector.broadcast %cst_3 : f32 to vector<2x1x1xf32>
    %6 = arith.mulf %4, %5 : vector<2x1x1xf32>
    %7 = vector.broadcast %6 : vector<2x1x1xf32> to vector<2x32x32xf32>
    %8 = arith.subf %0, %7 : vector<2x32x32xf32>
    %9 = arith.mulf %8, %8 : vector<2x32x32xf32>
    %cst_4 = arith.constant dense<0.000000e+00> : vector<2x32xf32>
    %10 = vector.multi_reduction <add>, %9, %cst_4 [2] : vector<2x32x32xf32> to vector<2x32xf32>
    %11 = vector.shape_cast %10 : vector<2x32xf32> to vector<2x32x1xf32>
    %cst_5 = arith.constant dense<0.000000e+00> : vector<2x1xf32>
    %12 = vector.multi_reduction <add>, %11, %cst_5 [1] : vector<2x32x1xf32> to vector<2x1xf32>
    %13 = vector.shape_cast %12 : vector<2x1xf32> to vector<2x1x1xf32>
    %cst_6 = arith.constant 9.765625E-4 : f32
    %14 = vector.broadcast %cst_6 : f32 to vector<2x1x1xf32>
    %15 = arith.mulf %13, %14 : vector<2x1x1xf32>
    %cst_7 = arith.constant 9.99999974E-6 : f32
    %16 = vector.broadcast %cst_7 : f32 to vector<2x1x1xf32>
    %17 = arith.addf %15, %16 : vector<2x1x1xf32>
    %18 = math.rsqrt %17 : vector<2x1x1xf32>
    %19 = vector.broadcast %18 : vector<2x1x1xf32> to vector<2x32x32xf32>
    %20 = arith.mulf %8, %19 : vector<2x32x32xf32>
    %c0_8 = arith.constant 0 : index
    %c0_9 = arith.constant 0 : index
    %21 = vector.load %arg1[%c0_8, %c0_9] : memref<232x128xf32, #tpu.memory_space<vmem>>, vector<32x24xf32>
    %c32 = arith.constant 32 : index
    %c0_10 = arith.constant 0 : index
    %22 = vector.load %arg1[%c32, %c0_10] : memref<232x128xf32, #tpu.memory_space<vmem>>, vector<32x16xf32>
    %23 = tpu.transpose %20, [0, 2, 1] : vector<2x32x32xf32> -> vector<2x32x32xf32>
    %24 = vector.shape_cast %23 : vector<2x32x32xf32> to vector<64x32xf32>
    %cst_11 = arith.constant dense<0.000000e+00> : vector<64x24xf32>
    %25 = tpu.matmul %24, %21, %cst_11 {dimension_numbers = #tpu.dot_dimension_numbers<[1], [0], [0], [1], [0, 0, 1, 1], [], []>} : vector<64x32xf32>, vector<32x24xf32>, vector<64x24xf32> -> vector<64x24xf32>
    %26 = vector.shape_cast %25 : vector<64x24xf32> to vector<2x32x24xf32>
    %27 = tpu.transpose %26, [0, 2, 1] : vector<2x32x24xf32> -> vector<2x24x32xf32>
    %28 = vector.shape_cast %27 : vector<2x24x32xf32> to vector<48x32xf32>
    %cst_12 = arith.constant dense<0.000000e+00> : vector<48x16xf32>
    %29 = tpu.matmul %28, %22, %cst_12 {dimension_numbers = #tpu.dot_dimension_numbers<[1], [0], [0], [1], [0, 0, 1, 1], [], []>} : vector<48x32xf32>, vector<32x16xf32>, vector<48x16xf32> -> vector<48x16xf32>
    %30 = vector.shape_cast %29 : vector<48x16xf32> to vector<2x24x16xf32>
    %cst_13 = arith.constant dense<0.000000e+00> : vector<2x24xf32>
    %31 = vector.multi_reduction <add>, %30, %cst_13 [2] : vector<2x24x16xf32> to vector<2x24xf32>
    %32 = vector.shape_cast %31 : vector<2x24xf32> to vector<2x24x1xf32>
    %cst_14 = arith.constant 1.600000e+01 : f32
    %33 = vector.broadcast %cst_14 : f32 to vector<2x24x1xf32>
    %34 = arith.divf %32, %33 : vector<2x24x1xf32>
    %35 = vector.broadcast %34 : vector<2x24x1xf32> to vector<2x24x16xf32>
    %36 = arith.subf %30, %35 : vector<2x24x16xf32>
    %37 = arith.mulf %36, %36 : vector<2x24x16xf32>
    %cst_15 = arith.constant dense<0.000000e+00> : vector<2x24xf32>
    %38 = vector.multi_reduction <add>, %37, %cst_15 [2] : vector<2x24x16xf32> to vector<2x24xf32>
    %39 = vector.shape_cast %38 : vector<2x24xf32> to vector<2x24x1xf32>
    %cst_16 = arith.constant 1.600000e+01 : f32
    %40 = vector.broadcast %cst_16 : f32 to vector<2x24x1xf32>
    %41 = arith.divf %39, %40 : vector<2x24x1xf32>
    %42 = vector.broadcast %34 : vector<2x24x1xf32> to vector<2x24x16xf32>
    %43 = arith.subf %30, %42 : vector<2x24x16xf32>
    %cst_17 = arith.constant 9.99999974E-6 : f32
    %44 = vector.broadcast %cst_17 : f32 to vector<2x24x1xf32>
    %45 = arith.addf %41, %44 : vector<2x24x1xf32>
    %46 = math.rsqrt %45 : vector<2x24x1xf32>
    %47 = vector.broadcast %46 : vector<2x24x1xf32> to vector<2x24x16xf32>
    %48 = arith.mulf %43, %47 : vector<2x24x16xf32>
    %c64 = arith.constant 64 : index
    %c0_18 = arith.constant 0 : index
    %49 = vector.load %arg1[%c64, %c0_18] : memref<232x128xf32, #tpu.memory_space<vmem>>, vector<24x16xf32>
    %c88 = arith.constant 88 : index
    %c0_19 = arith.constant 0 : index
    %50 = vector.load %arg1[%c88, %c0_19] : memref<232x128xf32, #tpu.memory_space<vmem>>, vector<16x8xf32>
    %51 = tpu.transpose %48, [0, 2, 1] : vector<2x24x16xf32> -> vector<2x16x24xf32>
    %52 = vector.shape_cast %51 : vector<2x16x24xf32> to vector<32x24xf32>
    %cst_20 = arith.constant dense<0.000000e+00> : vector<32x16xf32>
    %53 = tpu.matmul %52, %49, %cst_20 {dimension_numbers = #tpu.dot_dimension_numbers<[1], [0], [0], [1], [0, 0, 1, 1], [], []>} : vector<32x24xf32>, vector<24x16xf32>, vector<32x16xf32> -> vector<32x16xf32>
    %54 = vector.shape_cast %53 : vector<32x16xf32> to vector<2x16x16xf32>
    %55 = tpu.transpose %54, [0, 2, 1] : vector<2x16x16xf32> -> vector<2x16x16xf32>
    %56 = vector.shape_cast %55 : vector<2x16x16xf32> to vector<32x16xf32>
    %cst_21 = arith.constant dense<0.000000e+00> : vector<32x8xf32>
    %57 = tpu.matmul %56, %50, %cst_21 {dimension_numbers = #tpu.dot_dimension_numbers<[1], [0], [0], [1], [0, 0, 1, 1], [], []>} : vector<32x16xf32>, vector<16x8xf32>, vector<32x8xf32> -> vector<32x8xf32>
    %58 = vector.shape_cast %57 : vector<32x8xf32> to vector<2x16x8xf32>
    %cst_22 = arith.constant dense<0.000000e+00> : vector<2x16xf32>
    %59 = vector.multi_reduction <add>, %58, %cst_22 [2] : vector<2x16x8xf32> to vector<2x16xf32>
    %60 = vector.shape_cast %59 : vector<2x16xf32> to vector<2x16x1xf32>
    %cst_23 = arith.constant 8.000000e+00 : f32
    %61 = vector.broadcast %cst_23 : f32 to vector<2x16x1xf32>
    %62 = arith.divf %60, %61 : vector<2x16x1xf32>
    %63 = vector.broadcast %62 : vector<2x16x1xf32> to vector<2x16x8xf32>
    %64 = arith.subf %58, %63 : vector<2x16x8xf32>
    %65 = arith.mulf %64, %64 : vector<2x16x8xf32>
    %cst_24 = arith.constant dense<0.000000e+00> : vector<2x16xf32>
    %66 = vector.multi_reduction <add>, %65, %cst_24 [2] : vector<2x16x8xf32> to vector<2x16xf32>
    %67 = vector.shape_cast %66 : vector<2x16xf32> to vector<2x16x1xf32>
    %cst_25 = arith.constant 8.000000e+00 : f32
    %68 = vector.broadcast %cst_25 : f32 to vector<2x16x1xf32>
    %69 = arith.divf %67, %68 : vector<2x16x1xf32>
    %70 = vector.broadcast %62 : vector<2x16x1xf32> to vector<2x16x8xf32>
    %71 = arith.subf %58, %70 : vector<2x16x8xf32>
    %cst_26 = arith.constant 9.99999974E-6 : f32
    %72 = vector.broadcast %cst_26 : f32 to vector<2x16x1xf32>
    %73 = arith.addf %69, %72 : vector<2x16x1xf32>
    %74 = math.rsqrt %73 : vector<2x16x1xf32>
    %75 = vector.broadcast %74 : vector<2x16x1xf32> to vector<2x16x8xf32>
    %76 = arith.mulf %71, %75 : vector<2x16x8xf32>
    %77 = tpu.transpose %76, [0, 2, 1] : vector<2x16x8xf32> -> vector<2x8x16xf32>
    %c104 = arith.constant 104 : index
    %c0_27 = arith.constant 0 : index
    %78 = vector.load %arg1[%c104, %c0_27] : memref<232x128xf32, #tpu.memory_space<vmem>>, vector<16x8xf32>
    %c0_28 = arith.constant 0 : index
    %c0_29 = arith.constant 0 : index
    %79 = vector.load %arg2[%c0_28, %c0_29] : memref<8x128xf32, #tpu.memory_space<vmem>>, vector<1x8xf32>
    %80 = vector.extract_strided_slice %77 {offsets = [0, 0, 0], sizes = [2, 1, 16], strides = [1, 1, 1]} : vector<2x8x16xf32> to vector<2x1x16xf32>
    %81 = vector.shape_cast %80 : vector<2x1x16xf32> to vector<2x16xf32>
    %cst_30 = arith.constant dense<0.000000e+00> : vector<2x8xf32>
    %82 = tpu.matmul %81, %78, %cst_30 {dimension_numbers = #tpu.dot_dimension_numbers<[1], [0], [0], [1], [0, 0, 1, 1], [], []>} : vector<2x16xf32>, vector<16x8xf32>, vector<2x8xf32> -> vector<2x8xf32>
    %83 = vector.broadcast %79 : vector<1x8xf32> to vector<2x8xf32>
    %84 = arith.addf %82, %83 : vector<2x8xf32>
    %cst_31 = arith.constant 0.000000e+00 : f32
    %85 = vector.broadcast %cst_31 : f32 to vector<2x8xf32>
    %86 = arith.maximumf %84, %85 : vector<2x8xf32>
    %87 = vector.extract_strided_slice %77 {offsets = [0, 1, 0], sizes = [2, 1, 16], strides = [1, 1, 1]} : vector<2x8x16xf32> to vector<2x1x16xf32>
    %88 = vector.shape_cast %87 : vector<2x1x16xf32> to vector<2x16xf32>
    %cst_32 = arith.constant dense<0.000000e+00> : vector<2x8xf32>
    %89 = tpu.matmul %88, %78, %cst_32 {dimension_numbers = #tpu.dot_dimension_numbers<[1], [0], [0], [1], [0, 0, 1, 1], [], []>} : vector<2x16xf32>, vector<16x8xf32>, vector<2x8xf32> -> vector<2x8xf32>
    %90 = vector.broadcast %79 : vector<1x8xf32> to vector<2x8xf32>
    %91 = arith.addf %89, %90 : vector<2x8xf32>
    %cst_33 = arith.constant 0.000000e+00 : f32
    %92 = vector.broadcast %cst_33 : f32 to vector<2x8xf32>
    %93 = arith.maximumf %91, %92 : vector<2x8xf32>
    %94 = vector.extract_strided_slice %77 {offsets = [0, 2, 0], sizes = [2, 1, 16], strides = [1, 1, 1]} : vector<2x8x16xf32> to vector<2x1x16xf32>
    %95 = vector.shape_cast %94 : vector<2x1x16xf32> to vector<2x16xf32>
    %cst_34 = arith.constant dense<0.000000e+00> : vector<2x8xf32>
    %96 = tpu.matmul %95, %78, %cst_34 {dimension_numbers = #tpu.dot_dimension_numbers<[1], [0], [0], [1], [0, 0, 1, 1], [], []>} : vector<2x16xf32>, vector<16x8xf32>, vector<2x8xf32> -> vector<2x8xf32>
    %97 = vector.broadcast %79 : vector<1x8xf32> to vector<2x8xf32>
    %98 = arith.addf %96, %97 : vector<2x8xf32>
    %cst_35 = arith.constant 0.000000e+00 : f32
    %99 = vector.broadcast %cst_35 : f32 to vector<2x8xf32>
    %100 = arith.maximumf %98, %99 : vector<2x8xf32>
    %101 = vector.extract_strided_slice %77 {offsets = [0, 3, 0], sizes = [2, 1, 16], strides = [1, 1, 1]} : vector<2x8x16xf32> to vector<2x1x16xf32>
    %102 = vector.shape_cast %101 : vector<2x1x16xf32> to vector<2x16xf32>
    %cst_36 = arith.constant dense<0.000000e+00> : vector<2x8xf32>
    %103 = tpu.matmul %102, %78, %cst_36 {dimension_numbers = #tpu.dot_dimension_numbers<[1], [0], [0], [1], [0, 0, 1, 1], [], []>} : vector<2x16xf32>, vector<16x8xf32>, vector<2x8xf32> -> vector<2x8xf32>
    %104 = vector.broadcast %79 : vector<1x8xf32> to vector<2x8xf32>
    %105 = arith.addf %103, %104 : vector<2x8xf32>
    %cst_37 = arith.constant 0.000000e+00 : f32
    %106 = vector.broadcast %cst_37 : f32 to vector<2x8xf32>
    %107 = arith.maximumf %105, %106 : vector<2x8xf32>
    %108 = vector.extract_strided_slice %77 {offsets = [0, 4, 0], sizes = [2, 1, 16], strides = [1, 1, 1]} : vector<2x8x16xf32> to vector<2x1x16xf32>
    %109 = vector.shape_cast %108 : vector<2x1x16xf32> to vector<2x16xf32>
    %cst_38 = arith.constant dense<0.000000e+00> : vector<2x8xf32>
    %110 = tpu.matmul %109, %78, %cst_38 {dimension_numbers = #tpu.dot_dimension_numbers<[1], [0], [0], [1], [0, 0, 1, 1], [], []>} : vector<2x16xf32>, vector<16x8xf32>, vector<2x8xf32> -> vector<2x8xf32>
    %111 = vector.broadcast %79 : vector<1x8xf32> to vector<2x8xf32>
    %112 = arith.addf %110, %111 : vector<2x8xf32>
    %cst_39 = arith.constant 0.000000e+00 : f32
    %113 = vector.broadcast %cst_39 : f32 to vector<2x8xf32>
    %114 = arith.maximumf %112, %113 : vector<2x8xf32>
    %115 = vector.extract_strided_slice %77 {offsets = [0, 5, 0], sizes = [2, 1, 16], strides = [1, 1, 1]} : vector<2x8x16xf32> to vector<2x1x16xf32>
    %116 = vector.shape_cast %115 : vector<2x1x16xf32> to vector<2x16xf32>
    %cst_40 = arith.constant dense<0.000000e+00> : vector<2x8xf32>
    %117 = tpu.matmul %116, %78, %cst_40 {dimension_numbers = #tpu.dot_dimension_numbers<[1], [0], [0], [1], [0, 0, 1, 1], [], []>} : vector<2x16xf32>, vector<16x8xf32>, vector<2x8xf32> -> vector<2x8xf32>
    %118 = vector.broadcast %79 : vector<1x8xf32> to vector<2x8xf32>
    %119 = arith.addf %117, %118 : vector<2x8xf32>
    %cst_41 = arith.constant 0.000000e+00 : f32
    %120 = vector.broadcast %cst_41 : f32 to vector<2x8xf32>
    %121 = arith.maximumf %119, %120 : vector<2x8xf32>
    %122 = vector.extract_strided_slice %77 {offsets = [0, 6, 0], sizes = [2, 1, 16], strides = [1, 1, 1]} : vector<2x8x16xf32> to vector<2x1x16xf32>
    %123 = vector.shape_cast %122 : vector<2x1x16xf32> to vector<2x16xf32>
    %cst_42 = arith.constant dense<0.000000e+00> : vector<2x8xf32>
    %124 = tpu.matmul %123, %78, %cst_42 {dimension_numbers = #tpu.dot_dimension_numbers<[1], [0], [0], [1], [0, 0, 1, 1], [], []>} : vector<2x16xf32>, vector<16x8xf32>, vector<2x8xf32> -> vector<2x8xf32>
    %125 = vector.broadcast %79 : vector<1x8xf32> to vector<2x8xf32>
    %126 = arith.addf %124, %125 : vector<2x8xf32>
    %cst_43 = arith.constant 0.000000e+00 : f32
    %127 = vector.broadcast %cst_43 : f32 to vector<2x8xf32>
    %128 = arith.maximumf %126, %127 : vector<2x8xf32>
    %129 = vector.extract_strided_slice %77 {offsets = [0, 7, 0], sizes = [2, 1, 16], strides = [1, 1, 1]} : vector<2x8x16xf32> to vector<2x1x16xf32>
    %130 = vector.shape_cast %129 : vector<2x1x16xf32> to vector<2x16xf32>
    %cst_44 = arith.constant dense<0.000000e+00> : vector<2x8xf32>
    %131 = tpu.matmul %130, %78, %cst_44 {dimension_numbers = #tpu.dot_dimension_numbers<[1], [0], [0], [1], [0, 0, 1, 1], [], []>} : vector<2x16xf32>, vector<16x8xf32>, vector<2x8xf32> -> vector<2x8xf32>
    %132 = vector.broadcast %79 : vector<1x8xf32> to vector<2x8xf32>
    %133 = arith.addf %131, %132 : vector<2x8xf32>
    %cst_45 = arith.constant 0.000000e+00 : f32
    %134 = vector.broadcast %cst_45 : f32 to vector<2x8xf32>
    %135 = arith.maximumf %133, %134 : vector<2x8xf32>
    %136 = tpu.concatenate %86, %93, %100, %107, %114, %121, %128, %135 in 1 : vector<2x8xf32>, vector<2x8xf32>, vector<2x8xf32>, vector<2x8xf32>, vector<2x8xf32>, vector<2x8xf32>, vector<2x8xf32>, vector<2x8xf32> -> vector<2x64xf32>
    %c120 = arith.constant 120 : index
    %c0_46 = arith.constant 0 : index
    %137 = vector.load %arg1[%c120, %c0_46] : memref<232x128xf32, #tpu.memory_space<vmem>>, vector<64x30xf32>
    %cst_47 = arith.constant dense<0.000000e+00> : vector<2x30xf32>
    %138 = tpu.matmul %136, %137, %cst_47 {dimension_numbers = #tpu.dot_dimension_numbers<[1], [0], [0], [1], [0, 0, 1, 1], [], []>} : vector<2x64xf32>, vector<64x30xf32>, vector<2x30xf32> -> vector<2x30xf32>
    %c1 = arith.constant 1 : index
    %c0_48 = arith.constant 0 : index
    %139 = vector.load %arg2[%c1, %c0_48] : memref<8x128xf32, #tpu.memory_space<vmem>>, vector<1x30xf32>
    %140 = vector.broadcast %139 : vector<1x30xf32> to vector<2x30xf32>
    %141 = arith.addf %138, %140 : vector<2x30xf32>
    %c2 = arith.constant 2 : index
    %c0_49 = arith.constant 0 : index
    %142 = vector.load %arg2[%c2, %c0_49] : memref<8x128xf32, #tpu.memory_space<vmem>>, vector<1x30xf32>
    %c3 = arith.constant 3 : index
    %c0_50 = arith.constant 0 : index
    %143 = vector.load %arg2[%c3, %c0_50] : memref<8x128xf32, #tpu.memory_space<vmem>>, vector<1x30xf32>
    %cst_51 = arith.constant dense<0.000000e+00> : vector<30xf32>
    %144 = vector.multi_reduction <add>, %141, %cst_51 [0] : vector<2x30xf32> to vector<30xf32>
    %145 = vector.shape_cast %144 : vector<30xf32> to vector<1x30xf32>
    %cst_52 = arith.constant 2.000000e+00 : f32
    %146 = vector.broadcast %cst_52 : f32 to vector<1x30xf32>
    %147 = arith.divf %145, %146 : vector<1x30xf32>
    %148 = vector.broadcast %147 : vector<1x30xf32> to vector<2x30xf32>
    %149 = arith.subf %141, %148 : vector<2x30xf32>
    %150 = arith.mulf %149, %149 : vector<2x30xf32>
    %cst_53 = arith.constant dense<0.000000e+00> : vector<30xf32>
    %151 = vector.multi_reduction <add>, %150, %cst_53 [0] : vector<2x30xf32> to vector<30xf32>
    %152 = vector.shape_cast %151 : vector<30xf32> to vector<1x30xf32>
    %cst_54 = arith.constant 2.000000e+00 : f32
    %153 = vector.broadcast %cst_54 : f32 to vector<1x30xf32>
    %154 = arith.divf %152, %153 : vector<1x30xf32>
    %155 = vector.broadcast %147 : vector<1x30xf32> to vector<2x30xf32>
    %156 = arith.subf %141, %155 : vector<2x30xf32>
    %cst_55 = arith.constant 9.99999974E-6 : f32
    %157 = vector.broadcast %cst_55 : f32 to vector<1x30xf32>
    %158 = arith.addf %154, %157 : vector<1x30xf32>
    %159 = math.rsqrt %158 : vector<1x30xf32>
    %160 = vector.broadcast %159 : vector<1x30xf32> to vector<2x30xf32>
    %161 = arith.mulf %156, %160 : vector<2x30xf32>
    %162 = vector.broadcast %142 : vector<1x30xf32> to vector<2x30xf32>
    %163 = arith.mulf %161, %162 : vector<2x30xf32>
    %164 = vector.broadcast %143 : vector<1x30xf32> to vector<2x30xf32>
    %165 = arith.addf %163, %164 : vector<2x30xf32>
    %cst_56 = arith.constant 0.000000e+00 : f32
    %166 = vector.broadcast %cst_56 : f32 to vector<2x30xf32>
    %167 = arith.maximumf %165, %166 : vector<2x30xf32>
    %c184 = arith.constant 184 : index
    %c0_57 = arith.constant 0 : index
    %168 = vector.load %arg1[%c184, %c0_57] : memref<232x128xf32, #tpu.memory_space<vmem>>, vector<30x16xf32>
    %cst_58 = arith.constant dense<0.000000e+00> : vector<2x16xf32>
    %169 = tpu.matmul %167, %168, %cst_58 {dimension_numbers = #tpu.dot_dimension_numbers<[1], [0], [0], [1], [0, 0, 1, 1], [], []>} : vector<2x30xf32>, vector<30x16xf32>, vector<2x16xf32> -> vector<2x16xf32>
    %c4 = arith.constant 4 : index
    %c0_59 = arith.constant 0 : index
    %170 = vector.load %arg2[%c4, %c0_59] : memref<8x128xf32, #tpu.memory_space<vmem>>, vector<1x16xf32>
    %171 = vector.broadcast %170 : vector<1x16xf32> to vector<2x16xf32>
    %172 = arith.addf %169, %171 : vector<2x16xf32>
    %c5 = arith.constant 5 : index
    %c0_60 = arith.constant 0 : index
    %173 = vector.load %arg2[%c5, %c0_60] : memref<8x128xf32, #tpu.memory_space<vmem>>, vector<1x16xf32>
    %c6 = arith.constant 6 : index
    %c0_61 = arith.constant 0 : index
    %174 = vector.load %arg2[%c6, %c0_61] : memref<8x128xf32, #tpu.memory_space<vmem>>, vector<1x16xf32>
    %cst_62 = arith.constant dense<0.000000e+00> : vector<16xf32>
    %175 = vector.multi_reduction <add>, %172, %cst_62 [0] : vector<2x16xf32> to vector<16xf32>
    %176 = vector.shape_cast %175 : vector<16xf32> to vector<1x16xf32>
    %cst_63 = arith.constant 2.000000e+00 : f32
    %177 = vector.broadcast %cst_63 : f32 to vector<1x16xf32>
    %178 = arith.divf %176, %177 : vector<1x16xf32>
    %179 = vector.broadcast %178 : vector<1x16xf32> to vector<2x16xf32>
    %180 = arith.subf %172, %179 : vector<2x16xf32>
    %181 = arith.mulf %180, %180 : vector<2x16xf32>
    %cst_64 = arith.constant dense<0.000000e+00> : vector<16xf32>
    %182 = vector.multi_reduction <add>, %181, %cst_64 [0] : vector<2x16xf32> to vector<16xf32>
    %183 = vector.shape_cast %182 : vector<16xf32> to vector<1x16xf32>
    %cst_65 = arith.constant 2.000000e+00 : f32
    %184 = vector.broadcast %cst_65 : f32 to vector<1x16xf32>
    %185 = arith.divf %183, %184 : vector<1x16xf32>
    %186 = vector.broadcast %178 : vector<1x16xf32> to vector<2x16xf32>
    %187 = arith.subf %172, %186 : vector<2x16xf32>
    %cst_66 = arith.constant 9.99999974E-6 : f32
    %188 = vector.broadcast %cst_66 : f32 to vector<1x16xf32>
    %189 = arith.addf %185, %188 : vector<1x16xf32>
    %190 = math.rsqrt %189 : vector<1x16xf32>
    %191 = vector.broadcast %190 : vector<1x16xf32> to vector<2x16xf32>
    %192 = arith.mulf %187, %191 : vector<2x16xf32>
    %193 = vector.broadcast %173 : vector<1x16xf32> to vector<2x16xf32>
    %194 = arith.mulf %192, %193 : vector<2x16xf32>
    %195 = vector.broadcast %174 : vector<1x16xf32> to vector<2x16xf32>
    %196 = arith.addf %194, %195 : vector<2x16xf32>
    %cst_67 = arith.constant 0.000000e+00 : f32
    %197 = vector.broadcast %cst_67 : f32 to vector<2x16xf32>
    %198 = arith.maximumf %196, %197 : vector<2x16xf32>
    %c216 = arith.constant 216 : index
    %c0_68 = arith.constant 0 : index
    %199 = vector.load %arg1[%c216, %c0_68] : memref<232x128xf32, #tpu.memory_space<vmem>>, vector<16x4xf32>
    %cst_69 = arith.constant dense<0.000000e+00> : vector<2x4xf32>
    %200 = tpu.matmul %198, %199, %cst_69 {dimension_numbers = #tpu.dot_dimension_numbers<[1], [0], [0], [1], [0, 0, 1, 1], [], []>} : vector<2x16xf32>, vector<16x4xf32>, vector<2x4xf32> -> vector<2x4xf32>
    %c7 = arith.constant 7 : index
    %c0_70 = arith.constant 0 : index
    %201 = vector.load %arg2[%c7, %c0_70] : memref<8x128xf32, #tpu.memory_space<vmem>>, vector<1x4xf32>
    %202 = vector.broadcast %201 : vector<1x4xf32> to vector<2x4xf32>
    %203 = arith.addf %200, %202 : vector<2x4xf32>
    %cst_71 = arith.constant dense<0xFF800000> : vector<2xf32>
    %204 = vector.multi_reduction <maximumf>, %203, %cst_71 [1] : vector<2x4xf32> to vector<2xf32>
    %205 = vector.shape_cast %204 : vector<2xf32> to vector<2x1xf32>
    %206 = vector.broadcast %205 : vector<2x1xf32> to vector<2x4xf32>
    %207 = arith.subf %203, %206 : vector<2x4xf32>
    %208 = math.exp %207 : vector<2x4xf32>
    %cst_72 = arith.constant dense<0.000000e+00> : vector<2xf32>
    %209 = vector.multi_reduction <add>, %208, %cst_72 [1] : vector<2x4xf32> to vector<2xf32>
    %210 = vector.shape_cast %209 : vector<2xf32> to vector<2x1xf32>
    %211 = tpu.reciprocal %210 : vector<2x1xf32> -> vector<2x1xf32>
    %212 = vector.broadcast %211 : vector<2x1xf32> to vector<2x4xf32>
    %213 = arith.mulf %208, %212 : vector<2x4xf32>
    %c0_73 = arith.constant 0 : index
    %c0_74 = arith.constant 0 : index
    %214 = vector.load %arg3[%c0_73, %c0_74] : memref<2x4xf32, #tpu.memory_space<vmem>>, vector<2x4xf32>
    tpu.vector_store %arg3[%c0_73, %c0_74], %213 {strides = array<i32>} : memref<2x4xf32, #tpu.memory_space<vmem>>, vector<2x4xf32>,
    return
  }
}

</mosaic_0001>

<llo_original>
// kernel: tpu_custom_call.1
$region0: #{tpu_custom_call.1}
  #allocation0 [shape = 'u32[]', space=smem, size = 0x4, offset = 0x4, fixed_abs, tag = 'smem constant byte address 0x4 - core index']
  #allocation1 [shape = 'u32[144,128]{1,0:T(1,128)}', space=vmem, size = 0x12000, scoped, tag = 'internal scratch']
  %s0 = inlined_call_operand.hbm [shape: f32[2,32,32], index: 0, kind: input, shape index: {}]
  %s1 = inlined_call_operand.hbm [shape: f32[232,128], index: 1, kind: input, shape index: {}]
  %s2 = inlined_call_operand.hbm [shape: f32[8,128], index: 2, kind: input, shape index: {}]
  %s3 = inlined_call_operand.hbm [shape: f32[2,4], index: 3, kind: output, shape index: {}]
  %s4 = sld [smem:[#allocation0]]
  $region34: #{tpu_custom_call.1} parent=0
    _
  %s6 = ssub.s32 1, %s4
  %s7 = scalar_select 0, %s6, %s4
  $region1: #{tpu_custom_call.1} parent=0
    #allocation2 [shape = 'u8[32768]{0}', space=vmem, size = 0x8000, scoped, tag = 'input window, operand 0, single buffered']
    #allocation3 [shape = 's32[1]{0}', space=sflag, size = 0x4, scoped, tag = 'scoped memory for tpu_custom_call.1']
    #allocation4 [shape = 's32[1]{0}', space=sflag, size = 0x4, scoped, tag = 'scoped memory for tpu_custom_call.1']
    #allocation5 [shape = 'u8[118784]{0}', space=vmem, size = 0x1d000, scoped, tag = 'input window, operand 1, single buffered']
    #allocation6 [shape = 's32[1]{0}', space=sflag, size = 0x4, scoped, tag = 'scoped memory for tpu_custom_call.1']
    #allocation7 [shape = 'u8[4096]{0}', space=vmem, size = 0x1000, scoped, tag = 'input window, operand 2, single buffered']
    #allocation8 [shape = 'u8[1024]{0}', space=vmem, size = 0x400, scoped, tag = 'output window, operand 0, single buffered']
    %8 = vsyncpa [#allocation3], 0
    %9 = vsyncpa [#allocation6], 0
    %10 = vsyncpa [#allocation4], 0
    // Predicated region
    $region2: #{tpu_custom_call.1} parent=1 // pred_check
      _
    $region3: #{tpu_custom_call.1} parent=1 // pred_check_branch
      %12 = sbr.rel (0) target = $region5
    $region4: #{tpu_custom_call.1} parent=1 // pred_region
      %s14 = ssub.s32 1024, 1024
      %15 = vsyncadd [#allocation3], %s14
      %s16 = sshll.u32 [#allocation2], 4
      %s17 = int_to_ptr.vmem [resolvable:$true] %s16
      %22 = dma.hbm_to_vmem [thread:$0]  %s0, 1024, %s17, [#allocation3], 128, 128, 8
    $region5: #{tpu_custom_call.1} parent=1 // pred_fallthru
      _
    // Predicated region
    $region6: #{tpu_custom_call.1} parent=1 // pred_check
      _
    $region7: #{tpu_custom_call.1} parent=1 // pred_check_branch
      %24 = sbr.rel (0) target = $region9
    $region8: #{tpu_custom_call.1} parent=1 // pred_region
      %s26 = ssub.s32 3712, 3712
      %27 = vsyncadd [#allocation6], %s26
      %s28 = sshll.u32 [#allocation5], 4
      %s29 = int_to_ptr.vmem [resolvable:$true] %s28
      %34 = dma.hbm_to_vmem [thread:$0]  %s1, 3712, %s29, [#allocation6], 128, 128, 8
    $region9: #{tpu_custom_call.1} parent=1 // pred_fallthru
      _
    // Predicated region
    $region10: #{tpu_custom_call.1} parent=1 // pred_check
      _
    $region11: #{tpu_custom_call.1} parent=1 // pred_check_branch
      %36 = sbr.rel (0) target = $region13
    $region12: #{tpu_custom_call.1} parent=1 // pred_region
      %s38 = ssub.s32 128, 128
      %39 = vsyncadd [#allocation6], %s38
      %s41 = sshll.u32 [#allocation7], 4
      %s42 = int_to_ptr.vmem [resolvable:$true] %s41
      %44 = dma.hbm_to_vmem [thread:$0]  %s2, 128, %s42, [#allocation6]
    $region13: #{tpu_custom_call.1} parent=1 // pred_fallthru
      _
    // Predicated region
    $region14: #{tpu_custom_call.1} parent=1 // pred_check
      _
    $region15: #{tpu_custom_call.1} parent=1 // pred_check_branch
      %46 = sbr.rel (0) target = $region17
    $region16: #{tpu_custom_call.1} parent=1 // pred_region
      %47 = dma.done [#allocation3], 1024
    $region17: #{tpu_custom_call.1} parent=1 // pred_fallthru
      _
    // Predicated region
    $region18: #{tpu_custom_call.1} parent=1 // pred_check
      _
    $region19: #{tpu_custom_call.1} parent=1 // pred_check_branch
      %49 = sbr.rel (0) target = $region21
    $region20: #{tpu_custom_call.1} parent=1 // pred_region
      %50 = dma.done [#allocation6], 3712
    $region21: #{tpu_custom_call.1} parent=1 // pred_fallthru
      _
    // Predicated region
    $region22: #{tpu_custom_call.1} parent=1 // pred_check
      _
    $region23: #{tpu_custom_call.1} parent=1 // pred_check_branch
      %52 = sbr.rel (0) target = $region25
    $region24: #{tpu_custom_call.1} parent=1 // pred_region
      %53 = dma.done [#allocation6], 128
    $region25: #{tpu_custom_call.1} parent=1 // pred_fallthru
      _
    %v54 = vld [vmem:[#allocation2] sm:$0xff]
    %v55 = vld [vmem:[#allocation2 + $0x8] sm:$0xff]
    %v56 = vld [vmem:[#allocation2 + $0x10] sm:$0xff]
    %v57 = vld [vmem:[#allocation2 + $0x18] sm:$0xff]
    %v58 = vld [vmem:[#allocation2 + $0x20] sm:$0xff]
    %v59 = vld [vmem:[#allocation2 + $0x28] sm:$0xff]
    %v60 = vld [vmem:[#allocation2 + $0x30] sm:$0xff]
    %v61 = vld [vmem:[#allocation2 + $0x38] sm:$0xff]
    %vm62 = vcmask 261120
    %v63 = vsel %vm62, %v54, 0.0
    %64 = vadd.xlane.f32.xlu0 %v63
    %v65 = vpop.xlane.xlu0 %64
    %v66 = vsel %vm62, %v55, 0.0
    %67 = vadd.xlane.f32.xlu0 %v66
    %v68 = vpop.xlane.xlu0 %67
    %v69 = vsel %vm62, %v56, 0.0
    %70 = vadd.xlane.f32.xlu0 %v69
    %v71 = vpop.xlane.xlu0 %70
    %v72 = vsel %vm62, %v57, 0.0
    %73 = vadd.xlane.f32.xlu0 %v72
    %v74 = vpop.xlane.xlu0 %73
    %v75 = vsel %vm62, %v58, 0.0
    %76 = vadd.xlane.f32.xlu0 %v75
    %v77 = vpop.xlane.xlu0 %76
    %v78 = vsel %vm62, %v59, 0.0
    %79 = vadd.xlane.f32.xlu0 %v78
    %v80 = vpop.xlane.xlu0 %79
    %v81 = vsel %vm62, %v60, 0.0
    %82 = vadd.xlane.f32.xlu0 %v81
    %v83 = vpop.xlane.xlu0 %82
    %v84 = vsel %vm62, %v61, 0.0
    %85 = vadd.xlane.f32.xlu0 %v84
    %v86 = vpop.xlane.xlu0 %85
    %v87 = vadd.f32 %v65, %v68
    %v88 = vadd.f32 %v87, %v71
    %v89 = vadd.f32 %v88, %v74
    %v90 = vrot.slane %v89, 4
    %v91 = vadd.f32 %v89, %v90
    %v92 = vrot.slane %v91, 2
    %v93 = vadd.f32 %v91, %v92
    %v94 = vrot.slane %v93, 1
    %v95 = vadd.f32 %v93, %v94
    %v96 = vadd.f32 %v77, %v80
    %v97 = vadd.f32 %v96, %v83
    %v98 = vadd.f32 %v97, %v86
    %v99 = vrot.slane %v98, 4
    %v100 = vadd.f32 %v98, %v99
    %v101 = vrot.slane %v100, 2
    %v102 = vadd.f32 %v100, %v101
    %v103 = vrot.slane %v102, 1
    %v104 = vadd.f32 %v102, %v103
    %v105 = vmul.f32 %v95, 0.0009765625
    %v106 = vmul.f32 %v104, 0.0009765625
    %v107 = vsub.f32 %v54, %v105
    %v108 = vsub.f32 %v55, %v105
    %v109 = vsub.f32 %v56, %v105
    %v110 = vsub.f32 %v57, %v105
    %v111 = vsub.f32 %v58, %v106
    %v112 = vsub.f32 %v59, %v106
    %v113 = vsub.f32 %v60, %v106
    %v114 = vsub.f32 %v61, %v106
    %v115 = vmul.f32 %v107, %v107
    %v116 = vmul.f32 %v108, %v108
    %v117 = vmul.f32 %v109, %v109
    %v118 = vmul.f32 %v110, %v110
    %v119 = vmul.f32 %v111, %v111
    %v120 = vmul.f32 %v112, %v112
    %v121 = vmul.f32 %v113, %v113
    %v122 = vmul.f32 %v114, %v114
    %v123 = vsel %vm62, %v115, 0.0
    %124 = vadd.xlane.f32.xlu0 %v123
    %v125 = vpop.xlane.xlu0 %124
    %v126 = vsel %vm62, %v116, 0.0
    %127 = vadd.xlane.f32.xlu0 %v126
    %v128 = vpop.xlane.xlu0 %127
    %v129 = vsel %vm62, %v117, 0.0
    %130 = vadd.xlane.f32.xlu0 %v129
    %v131 = vpop.xlane.xlu0 %130
    %v132 = vsel %vm62, %v118, 0.0
    %133 = vadd.xlane.f32.xlu0 %v132
    %v134 = vpop.xlane.xlu0 %133
    %v135 = vsel %vm62, %v119, 0.0
    %136 = vadd.xlane.f32.xlu0 %v135
    %v137 = vpop.xlane.xlu0 %136
    %v138 = vsel %vm62, %v120, 0.0
    %139 = vadd.xlane.f32.xlu0 %v138
    %v140 = vpop.xlane.xlu0 %139
    %v141 = vsel %vm62, %v121, 0.0
    %142 = vadd.xlane.f32.xlu0 %v141
    %v143 = vpop.xlane.xlu0 %142
    %v144 = vsel %vm62, %v122, 0.0
    %145 = vadd.xlane.f32.xlu0 %v144
    %v146 = vpop.xlane.xlu0 %145
    %v147 = vadd.f32 %v125, %v128
    %v148 = vadd.f32 %v147, %v131
    %v149 = vadd.f32 %v148, %v134
    %v150 = vrot.slane %v149, 4
    %v151 = vadd.f32 %v149, %v150
    %v152 = vrot.slane %v151, 2
    %v153 = vadd.f32 %v151, %v152
    %v154 = vrot.slane %v153, 1
    %v155 = vadd.f32 %v153, %v154
    %v156 = vadd.f32 %v137, %v140
    %v157 = vadd.f32 %v156, %v143
    %v158 = vadd.f32 %v157, %v146
    %v159 = vrot.slane %v158, 4
    %v160 = vadd.f32 %v158, %v159
    %v161 = vrot.slane %v160, 2
    %v162 = vadd.f32 %v160, %v161
    %v163 = vrot.slane %v162, 1
    %v164 = vadd.f32 %v162, %v163
    %v165 = vmul.f32 %v155, 0.0009765625
    %v166 = vmul.f32 %v164, 0.0009765625
    %v167 = vadd.f32 %v165, 1e-05
    %v168 = vadd.f32 %v166, 1e-05
    %v169 = vrsqrt.pop %v167
    %v170 = vrsqrt.pop %v168
    %v171 = vmul.f32 %v107, %v169
    %v172 = vmul.f32 %v108, %v169
    %v173 = vmul.f32 %v109, %v169
    %v174 = vmul.f32 %v110, %v169
    %v175 = vmul.f32 %v111, %v170
    %v176 = vmul.f32 %v112, %v170
    %v177 = vmul.f32 %v113, %v170
    %v178 = vmul.f32 %v114, %v170
    %v179 = vld [vmem:[#allocation5] sm:$0xff]
    %v180 = vld [vmem:[#allocation5 + $0x8] sm:$0xff]
    %v181 = vld [vmem:[#allocation5 + $0x10] sm:$0xff]
    %v182 = vld [vmem:[#allocation5 + $0x18] sm:$0xff]
    %v183 = vld [vmem:[#allocation5 + $0x20] sm:$0xff]
    %v184 = vld [vmem:[#allocation5 + $0x28] sm:$0xff]
    %v185 = vld [vmem:[#allocation5 + $0x30] sm:$0xff]
    %v186 = vld [vmem:[#allocation5 + $0x38] sm:$0xff]
    %187 = vxpose.xlu0.b32.start [1/16] %v171, 128
    %188 = vxpose.xlu0.b32.cont [2/16] %v172, 128
    %189 = vxpose.xlu0.b32.cont [3/16] %v173, 128
    %190 = vxpose.xlu0.b32.cont [4/16] %v174, 128
    %191 = vxpose.xlu0.b32.cont [5/16] 0.0, 128
    %192 = vxpose.xlu0.b32.cont [6/16] 0.0, 128
    %193 = vxpose.xlu0.b32.cont [7/16] 0.0, 128
    %194 = vxpose.xlu0.b32.cont [8/16] 0.0, 128
    %195 = vxpose.xlu0.b32.cont [9/16] 0.0, 128
    %196 = vxpose.xlu0.b32.cont [10/16] 0.0, 128
    %197 = vxpose.xlu0.b32.cont [11/16] 0.0, 128
    %198 = vxpose.xlu0.b32.cont [12/16] 0.0, 128
    %199 = vxpose.xlu0.b32.cont [13/16] 0.0, 128
    %200 = vxpose.xlu0.b32.cont [14/16] 0.0, 128
    %201 = vxpose.xlu0.b32.cont [15/16] 0.0, 128
    %202 = vxpose.xlu0.b32.end [16/16] 0.0, 128
    %v203 = vpop.trf.xlu0
    %v204 = vpop.trf.xlu0
    %v205 = vpop.trf.xlu0
    %v206 = vpop.trf.xlu0
    %v207 = vpop.trf.xlu0
    %v208 = vpop.trf.xlu0
    %v209 = vpop.trf.xlu0
    %v210 = vpop.trf.xlu0
    %v211 = vpop.trf.xlu0
    %v212 = vpop.trf.xlu0
    %v213 = vpop.trf.xlu0
    %v214 = vpop.trf.xlu0
    %v215 = vpop.trf.xlu0
    %v216 = vpop.trf.xlu0
    %v217 = vpop.trf.xlu0
    %v218 = vpop.trf.xlu0
    %219 = vxpose.xlu0.b32.start [1/16] %v175, 128
    %220 = vxpose.xlu0.b32.cont [2/16] %v176, 128
    %221 = vxpose.xlu0.b32.cont [3/16] %v177, 128
    %222 = vxpose.xlu0.b32.cont [4/16] %v178, 128
    %223 = vxpose.xlu0.b32.cont [5/16] 0.0, 128
    %224 = vxpose.xlu0.b32.cont [6/16] 0.0, 128
    %225 = vxpose.xlu0.b32.cont [7/16] 0.0, 128
    %226 = vxpose.xlu0.b32.cont [8/16] 0.0, 128
    %227 = vxpose.xlu0.b32.cont [9/16] 0.0, 128
    %228 = vxpose.xlu0.b32.cont [10/16] 0.0, 128
    %229 = vxpose.xlu0.b32.cont [11/16] 0.0, 128
    %230 = vxpose.xlu0.b32.cont [12/16] 0.0, 128
    %231 = vxpose.xlu0.b32.cont [13/16] 0.0, 128
    %232 = vxpose.xlu0.b32.cont [14/16] 0.0, 128
    %233 = vxpose.xlu0.b32.cont [15/16] 0.0, 128
    %234 = vxpose.xlu0.b32.end [16/16] 0.0, 128
    %v235 = vpop.trf.xlu0
    %v236 = vpop.trf.xlu0
    %v237 = vpop.trf.xlu0
    %v238 = vpop.trf.xlu0
    %v239 = vpop.trf.xlu0
    %v240 = vpop.trf.xlu0
    %v241 = vpop.trf.xlu0
    %v242 = vpop.trf.xlu0
    %v243 = vpop.trf.xlu0
    %v244 = vpop.trf.xlu0
    %v245 = vpop.trf.xlu0
    %v246 = vpop.trf.xlu0
    %v247 = vpop.trf.xlu0
    %v248 = vpop.trf.xlu0
    %v249 = vpop.trf.xlu0
    %v250 = vpop.trf.xlu0
    %v252 = vsel %vm62, %v203, 0
    %v255 = vsel %vm62, %v204, 0
    %v258 = vsel %vm62, %v205, 0
    %v261 = vsel %vm62, %v206, 0
    %v264 = vsel %vm62, %v235, 0
    %v267 = vsel %vm62, %v236, 0
    %v270 = vsel %vm62, %v237, 0
    %v273 = vsel %vm62, %v238, 0
    %275 = vmatprep.subr.mxu0 0.0
    %276 = vmatpush1.msra.mxu0 0.0
    %277 = vmatprep.subr.mxu0 0.0
    %278 = vmatpush1.msra.mxu0 0.0
    %279 = vmatprep.subr.mxu0 0.0
    %280 = vmatpush1.msra.mxu0 0.0
    %281 = vmatprep.subr.mxu0 0.0
    %282 = vmatpush1.msra.mxu0 0.0
    %283 = vmatprep.subr.mxu0 0.0
    %284 = vmatpush1.msra.mxu0 0.0
    %285 = vmatprep.subr.mxu0 0.0
    %286 = vmatpush1.msra.mxu0 0.0
    %287 = vmatprep.subr.mxu0 0.0
    %288 = vmatpush1.msra.mxu0 0.0
    %289 = vmatprep.subr.mxu0 0.0
    %290 = vmatpush1.msra.mxu0 0.0
    %291 = vmatprep.subr.mxu0 0.0
    %292 = vmatpush1.msra.mxu0 0.0
    %293 = vmatprep.subr.mxu0 0.0
    %294 = vmatpush1.msra.mxu0 0.0
    %295 = vmatprep.subr.mxu0 0.0
    %296 = vmatpush1.msra.mxu0 0.0
    %297 = vmatprep.subr.mxu0 0.0
    %298 = vmatpush1.msra.mxu0 0.0
    %299 = vmatprep.subr.mxu0 0.0
    %300 = vmatpush1.msra.mxu0 %v182
    %301 = vmatprep.subr.mxu0 0.0
    %302 = vmatpush1.msra.mxu0 %v181
    %303 = vmatprep.subr.mxu0 0.0
    %304 = vmatpush1.msra.mxu0 %v180
    %305 = vmatprep.subr.mxu0 0.0
    %306 = vmatpush1.msra.mxu0 %v179
    %307 = vmatprep.subr.mxu0 0.0
    %308 = vmatpush2.msra.mxu0 0.0
    %309 = vmatprep.subr.mxu0 0.0
    %310 = vmatpush2.msra.mxu0 0.0
    %311 = vmatprep.subr.mxu0 0.0
    %312 = vmatpush2.msra.mxu0 0.0
    %313 = vmatprep.subr.mxu0 0.0
    %314 = vmatpush2.msra.mxu0 0.0
    %315 = vmatprep.subr.mxu0 0.0
    %316 = vmatpush2.msra.mxu0 0.0
    %317 = vmatprep.subr.mxu0 0.0
    %318 = vmatpush2.msra.mxu0 0.0
    %319 = vmatprep.subr.mxu0 0.0
    %320 = vmatpush2.msra.mxu0 0.0
    %321 = vmatprep.subr.mxu0 0.0
    %322 = vmatpush2.msra.mxu0 0.0
    %323 = vmatprep.subr.mxu0 0.0
    %324 = vmatpush2.msra.mxu0 0.0
    %325 = vmatprep.subr.mxu0 0.0
    %326 = vmatpush2.msra.mxu0 0.0
    %327 = vmatprep.subr.mxu0 0.0
    %328 = vmatpush2.msra.mxu0 0.0
    %329 = vmatprep.subr.mxu0 0.0
    %330 = vmatpush2.msra.mxu0 0.0
    %331 = vmatprep.subr.mxu0 0.0
    %332 = vmatpush2.msra.mxu0 0.0
    %333 = vmatprep.subr.mxu0 0.0
    %334 = vmatpush2.msra.mxu0 0.0
    %335 = vmatprep.subr.mxu0 0.0
    %336 = vmatpush2.msra.mxu0 0.0
    %337 = vmatprep.subr.mxu0 0.0
    %338 = vmatpush2.msra.mxu0 0.0
    %339 = vmatprep.mubr.f32.mxu0 0.0
    %340 = vmatmul.mubr.f32.gmra.mxu0 %v252
    %v341 = vpop.f32.mrf.mxu0
    %v342 = vadd.f32 0.0, %v341
    %v343 = vpop.f32.mrf.mxu0
    %344 = vmatprep.mubr.f32.mxu0 0.0
    %345 = vmatmul.mubr.f32.gmra.mxu0 %v255
    %v346 = vpop.f32.mrf.mxu0
    %v347 = vadd.f32 0.0, %v346
    %v348 = vpop.f32.mrf.mxu0
    %349 = vmatprep.mubr.f32.mxu0 0.0
    %350 = vmatmul.mubr.f32.gmra.mxu0 %v258
    %v351 = vpop.f32.mrf.mxu0
    %v352 = vadd.f32 0.0, %v351
    %v353 = vpop.f32.mrf.mxu0
    %354 = vmatprep.mubr.f32.mxu0 0.0
    %355 = vmatmul.mubr.f32.gmra.mxu0 %v261
    %v356 = vpop.f32.mrf.mxu0
    %v357 = vadd.f32 0.0, %v356
    %v358 = vpop.f32.mrf.mxu0
    %359 = vmatprep.mubr.f32.mxu0 0.0
    %360 = vmatmul.mubr.f32.gmra.mxu0 %v264
    %v361 = vpop.f32.mrf.mxu0
    %v362 = vadd.f32 0.0, %v361
    %v363 = vpop.f32.mrf.mxu0
    %364 = vmatprep.mubr.f32.mxu0 0.0
    %365 = vmatmul.mubr.f32.gmra.mxu0 %v267
    %v366 = vpop.f32.mrf.mxu0
    %v367 = vadd.f32 0.0, %v366
    %v368 = vpop.f32.mrf.mxu0
    %369 = vmatprep.mubr.f32.mxu0 0.0
    %370 = vmatmul.mubr.f32.gmra.mxu0 %v270
    %v371 = vpop.f32.mrf.mxu0
    %v372 = vadd.f32 0.0, %v371
    %v373 = vpop.f32.mrf.mxu0
    %374 = vmatprep.mubr.f32.mxu0 0.0
    %375 = vmatmul.mubr.f32.gmra.mxu0 %v273
    %v376 = vpop.f32.mrf.mxu0
    %v377 = vadd.f32 0.0, %v376
    %v378 = vpop.f32.mrf.mxu0
    %379 = vdwg.mxu0
    %380 = vxpose.xlu0.b32.start [1/16] %v342, 128
    %381 = vxpose.xlu0.b32.cont [2/16] %v347, 128
    %382 = vxpose.xlu0.b32.cont [3/16] %v352, 128
    %383 = vxpose.xlu0.b32.cont [4/16] %v357, 128
    %384 = vxpose.xlu0.b32.cont [5/16] 0.0, 128
    %385 = vxpose.xlu0.b32.cont [6/16] 0.0, 128
    %386 = vxpose.xlu0.b32.cont [7/16] 0.0, 128
    %387 = vxpose.xlu0.b32.cont [8/16] 0.0, 128
    %388 = vxpose.xlu0.b32.cont [9/16] 0.0, 128
    %389 = vxpose.xlu0.b32.cont [10/16] 0.0, 128
    %390 = vxpose.xlu0.b32.cont [11/16] 0.0, 128
    %391 = vxpose.xlu0.b32.cont [12/16] 0.0, 128
    %392 = vxpose.xlu0.b32.cont [13/16] 0.0, 128
    %393 = vxpose.xlu0.b32.cont [14/16] 0.0, 128
    %394 = vxpose.xlu0.b32.cont [15/16] 0.0, 128
    %395 = vxpose.xlu0.b32.end [16/16] 0.0, 128
    %v396 = vpop.trf.xlu0
    %v397 = vpop.trf.xlu0
    %v398 = vpop.trf.xlu0
    %v399 = vpop.trf.xlu0
    %v400 = vpop.trf.xlu0
    %v401 = vpop.trf.xlu0
    %v402 = vpop.trf.xlu0
    %v403 = vpop.trf.xlu0
    %v404 = vpop.trf.xlu0
    %v405 = vpop.trf.xlu0
    %v406 = vpop.trf.xlu0
    %v407 = vpop.trf.xlu0
    %v408 = vpop.trf.xlu0
    %v409 = vpop.trf.xlu0
    %v410 = vpop.trf.xlu0
    %v411 = vpop.trf.xlu0
    %412 = vxpose.xlu0.b32.start [1/16] %v362, 128
    %413 = vxpose.xlu0.b32.cont [2/16] %v367, 128
    %414 = vxpose.xlu0.b32.cont [3/16] %v372, 128
    %415 = vxpose.xlu0.b32.cont [4/16] %v377, 128
    %416 = vxpose.xlu0.b32.cont [5/16] 0.0, 128
    %417 = vxpose.xlu0.b32.cont [6/16] 0.0, 128
    %418 = vxpose.xlu0.b32.cont [7/16] 0.0, 128
    %419 = vxpose.xlu0.b32.cont [8/16] 0.0, 128
    %420 = vxpose.xlu0.b32.cont [9/16] 0.0, 128
    %421 = vxpose.xlu0.b32.cont [10/16] 0.0, 128
    %422 = vxpose.xlu0.b32.cont [11/16] 0.0, 128
    %423 = vxpose.xlu0.b32.cont [12/16] 0.0, 128
    %424 = vxpose.xlu0.b32.cont [13/16] 0.0, 128
    %425 = vxpose.xlu0.b32.cont [14/16] 0.0, 128
    %426 = vxpose.xlu0.b32.cont [15/16] 0.0, 128
    %427 = vxpose.xlu0.b32.end [16/16] 0.0, 128
    %v428 = vpop.trf.xlu0
    %v429 = vpop.trf.xlu0
    %v430 = vpop.trf.xlu0
    %v431 = vpop.trf.xlu0
    %v432 = vpop.trf.xlu0
    %v433 = vpop.trf.xlu0
    %v434 = vpop.trf.xlu0
    %v435 = vpop.trf.xlu0
    %v436 = vpop.trf.xlu0
    %v437 = vpop.trf.xlu0
    %v438 = vpop.trf.xlu0
    %v439 = vpop.trf.xlu0
    %v440 = vpop.trf.xlu0
    %v441 = vpop.trf.xlu0
    %v442 = vpop.trf.xlu0
    %v443 = vpop.trf.xlu0
    %v445 = vsel %vm62, %v396, 0
    %v448 = vsel %vm62, %v397, 0
    %v451 = vsel %vm62, %v398, 0
    %v454 = vsel %vm62, %v428, 0
    %v457 = vsel %vm62, %v429, 0
    %v460 = vsel %vm62, %v430, 0
    %462 = vmatprep.subr.mxu0 0.0
    %463 = vmatpush1.msra.mxu0 0.0
    %464 = vmatprep.subr.mxu0 0.0
    %465 = vmatpush1.msra.mxu0 0.0
    %466 = vmatprep.subr.mxu0 0.0
    %467 = vmatpush1.msra.mxu0 0.0
    %468 = vmatprep.subr.mxu0 0.0
    %469 = vmatpush1.msra.mxu0 0.0
    %470 = vmatprep.subr.mxu0 0.0
    %471 = vmatpush1.msra.mxu0 0.0
    %472 = vmatprep.subr.mxu0 0.0
    %473 = vmatpush1.msra.mxu0 0.0
    %474 = vmatprep.subr.mxu0 0.0
    %475 = vmatpush1.msra.mxu0 0.0
    %476 = vmatprep.subr.mxu0 0.0
    %477 = vmatpush1.msra.mxu0 0.0
    %478 = vmatprep.subr.mxu0 0.0
    %479 = vmatpush1.msra.mxu0 0.0
    %480 = vmatprep.subr.mxu0 0.0
    %481 = vmatpush1.msra.mxu0 0.0
    %482 = vmatprep.subr.mxu0 0.0
    %483 = vmatpush1.msra.mxu0 0.0
    %484 = vmatprep.subr.mxu0 0.0
    %485 = vmatpush1.msra.mxu0 0.0
    %486 = vmatprep.subr.mxu0 0.0
    %487 = vmatpush1.msra.mxu0 %v186
    %488 = vmatprep.subr.mxu0 0.0
    %489 = vmatpush1.msra.mxu0 %v185
    %490 = vmatprep.subr.mxu0 0.0
    %491 = vmatpush1.msra.mxu0 %v184
    %492 = vmatprep.subr.mxu0 0.0
    %493 = vmatpush1.msra.mxu0 %v183
    %494 = vmatprep.subr.mxu0 0.0
    %495 = vmatpush2.msra.mxu0 0.0
    %496 = vmatprep.subr.mxu0 0.0
    %497 = vmatpush2.msra.mxu0 0.0
    %498 = vmatprep.subr.mxu0 0.0
    %499 = vmatpush2.msra.mxu0 0.0
    %500 = vmatprep.subr.mxu0 0.0
    %501 = vmatpush2.msra.mxu0 0.0
    %502 = vmatprep.subr.mxu0 0.0
    %503 = vmatpush2.msra.mxu0 0.0
    %504 = vmatprep.subr.mxu0 0.0
    %505 = vmatpush2.msra.mxu0 0.0
    %506 = vmatprep.subr.mxu0 0.0
    %507 = vmatpush2.msra.mxu0 0.0
    %508 = vmatprep.subr.mxu0 0.0
    %509 = vmatpush2.msra.mxu0 0.0
    %510 = vmatprep.subr.mxu0 0.0
    %511 = vmatpush2.msra.mxu0 0.0
    %512 = vmatprep.subr.mxu0 0.0
    %513 = vmatpush2.msra.mxu0 0.0
    %514 = vmatprep.subr.mxu0 0.0
    %515 = vmatpush2.msra.mxu0 0.0
    %516 = vmatprep.subr.mxu0 0.0
    %517 = vmatpush2.msra.mxu0 0.0
    %518 = vmatprep.subr.mxu0 0.0
    %519 = vmatpush2.msra.mxu0 0.0
    %520 = vmatprep.subr.mxu0 0.0
    %521 = vmatpush2.msra.mxu0 0.0
    %522 = vmatprep.subr.mxu0 0.0
    %523 = vmatpush2.msra.mxu0 0.0
    %524 = vmatprep.subr.mxu0 0.0
    %525 = vmatpush2.msra.mxu0 0.0
    %526 = vmatprep.mubr.f32.mxu0 0.0
    %527 = vmatmul.mubr.f32.gmra.mxu0 %v445
    %v528 = vpop.f32.mrf.mxu0
    %v529 = vadd.f32 0.0, %v528
    %v530 = vpop.f32.mrf.mxu0
    %531 = vmatprep.mubr.f32.mxu0 0.0
    %532 = vmatmul.mubr.f32.gmra.mxu0 %v448
    %v533 = vpop.f32.mrf.mxu0
    %v534 = vadd.f32 0.0, %v533
    %v535 = vpop.f32.mrf.mxu0
    %536 = vmatprep.mubr.f32.mxu0 0.0
    %537 = vmatmul.mubr.f32.gmra.mxu0 %v451
    %v538 = vpop.f32.mrf.mxu0
    %v539 = vadd.f32 0.0, %v538
    %v540 = vpop.f32.mrf.mxu0
    %541 = vmatprep.mubr.f32.mxu0 0.0
    %542 = vmatmul.mubr.f32.gmra.mxu0 %v454
    %v543 = vpop.f32.mrf.mxu0
    %v544 = vadd.f32 0.0, %v543
    %v545 = vpop.f32.mrf.mxu0
    %546 = vmatprep.mubr.f32.mxu0 0.0
    %547 = vmatmul.mubr.f32.gmra.mxu0 %v457
    %v548 = vpop.f32.mrf.mxu0
    %v549 = vadd.f32 0.0, %v548
    %v550 = vpop.f32.mrf.mxu0
    %551 = vmatprep.mubr.f32.mxu0 0.0
    %552 = vmatmul.mubr.f32.gmra.mxu0 %v460
    %v553 = vpop.f32.mrf.mxu0
    %v554 = vadd.f32 0.0, %v553
    %v555 = vpop.f32.mrf.mxu0
    %556 = vdwg.mxu0
    %vm557 = vcmask 130048
    %v558 = vsel %vm557, %v529, 0.0
    %559 = vadd.xlane.f32.xlu0 %v558
    %v560 = vpop.xlane.xlu0 %559
    %v561 = vsel %vm557, %v534, 0.0
    %562 = vadd.xlane.f32.xlu0 %v561
    %v563 = vpop.xlane.xlu0 %562
    %v564 = vsel %vm557, %v539, 0.0
    %565 = vadd.xlane.f32.xlu0 %v564
    %v566 = vpop.xlane.xlu0 %565
    %v567 = vsel %vm557, %v544, 0.0
    %568 = vadd.xlane.f32.xlu0 %v567
    %v569 = vpop.xlane.xlu0 %568
    %v570 = vsel %vm557, %v549, 0.0
    %571 = vadd.xlane.f32.xlu0 %v570
    %v572 = vpop.xlane.xlu0 %571
    %v573 = vsel %vm557, %v554, 0.0
    %574 = vadd.xlane.f32.xlu0 %v573
    %v575 = vpop.xlane.xlu0 %574
    %v576 = vrcp.pop 16.0
    %v577 = vmul.f32 %v560, %v576
    %v578 = vmul.f32 %v563, %v576
    %v579 = vmul.f32 %v566, %v576
    %v580 = vmul.f32 %v569, %v576
    %v581 = vmul.f32 %v572, %v576
    %v582 = vmul.f32 %v575, %v576
    %v583 = vsub.f32 %v529, %v577
    %v584 = vsub.f32 %v534, %v578
    %v585 = vsub.f32 %v539, %v579
    %v586 = vsub.f32 %v544, %v580
    %v587 = vsub.f32 %v549, %v581
    %v588 = vsub.f32 %v554, %v582
    %v589 = vmul.f32 %v583, %v583
    %v590 = vmul.f32 %v584, %v584
    %v591 = vmul.f32 %v585, %v585
    %v592 = vmul.f32 %v586, %v586
    %v593 = vmul.f32 %v587, %v587
    %v594 = vmul.f32 %v588, %v588
    %v595 = vsel %vm557, %v589, 0.0
    %596 = vadd.xlane.f32.xlu0 %v595
    %v597 = vpop.xlane.xlu0 %596
    %v598 = vsel %vm557, %v590, 0.0
    %599 = vadd.xlane.f32.xlu0 %v598
    %v600 = vpop.xlane.xlu0 %599
    %v601 = vsel %vm557, %v591, 0.0
    %602 = vadd.xlane.f32.xlu0 %v601
    %v603 = vpop.xlane.xlu0 %602
    %v604 = vsel %vm557, %v592, 0.0
    %605 = vadd.xlane.f32.xlu0 %v604
    %v606 = vpop.xlane.xlu0 %605
    %v607 = vsel %vm557, %v593, 0.0
    %608 = vadd.xlane.f32.xlu0 %v607
    %v609 = vpop.xlane.xlu0 %608
    %v610 = vsel %vm557, %v594, 0.0
    %611 = vadd.xlane.f32.xlu0 %v610
    %v612 = vpop.xlane.xlu0 %611
    %v613 = vmul.f32 %v597, %v576
    %v614 = vmul.f32 %v600, %v576
    %v615 = vmul.f32 %v603, %v576
    %v616 = vmul.f32 %v606, %v576
    %v617 = vmul.f32 %v609, %v576
    %v618 = vmul.f32 %v612, %v576
    %v619 = vadd.f32 %v613, 1e-05
    %v620 = vadd.f32 %v614, 1e-05
    %v621 = vadd.f32 %v615, 1e-05
    %v622 = vadd.f32 %v616, 1e-05
    %v623 = vadd.f32 %v617, 1e-05
    %v624 = vadd.f32 %v618, 1e-05
    %v625 = vrsqrt.pop %v619
    %v626 = vrsqrt.pop %v620
    %v627 = vrsqrt.pop %v621
    %v628 = vrsqrt.pop %v622
    %v629 = vrsqrt.pop %v623
    %v630 = vrsqrt.pop %v624
    %v631 = vmul.f32 %v583, %v625
    %v632 = vmul.f32 %v584, %v626
    %v633 = vmul.f32 %v585, %v627
    %v634 = vmul.f32 %v586, %v628
    %v635 = vmul.f32 %v587, %v629
    %v636 = vmul.f32 %v588, %v630
    %v637 = vld [vmem:[#allocation5 + $0x40] sm:$0xff]
    %v638 = vld [vmem:[#allocation5 + $0x48] sm:$0xff]
    %v639 = vld [vmem:[#allocation5 + $0x50] sm:$0xff]
    %v640 = vld [vmem:[#allocation5 + $0x58] sm:$0xff]
    %v641 = vld [vmem:[#allocation5 + $0x60] sm:$0xff]
    %642 = vxpose.xlu0.b32.start [1/16] %v631, 128
    %643 = vxpose.xlu0.b32.cont [2/16] %v632, 128
    %644 = vxpose.xlu0.b32.cont [3/16] %v633, 128
    %645 = vxpose.xlu0.b32.cont [4/16] 0.0, 128
    %646 = vxpose.xlu0.b32.cont [5/16] 0.0, 128
    %647 = vxpose.xlu0.b32.cont [6/16] 0.0, 128
    %648 = vxpose.xlu0.b32.cont [7/16] 0.0, 128
    %649 = vxpose.xlu0.b32.cont [8/16] 0.0, 128
    %650 = vxpose.xlu0.b32.cont [9/16] 0.0, 128
    %651 = vxpose.xlu0.b32.cont [10/16] 0.0, 128
    %652 = vxpose.xlu0.b32.cont [11/16] 0.0, 128
    %653 = vxpose.xlu0.b32.cont [12/16] 0.0, 128
    %654 = vxpose.xlu0.b32.cont [13/16] 0.0, 128
    %655 = vxpose.xlu0.b32.cont [14/16] 0.0, 128
    %656 = vxpose.xlu0.b32.cont [15/16] 0.0, 128
    %657 = vxpose.xlu0.b32.end [16/16] 0.0, 128
    %v658 = vpop.trf.xlu0
    %v659 = vpop.trf.xlu0
    %v660 = vpop.trf.xlu0
    %v661 = vpop.trf.xlu0
    %v662 = vpop.trf.xlu0
    %v663 = vpop.trf.xlu0
    %v664 = vpop.trf.xlu0
    %v665 = vpop.trf.xlu0
    %v666 = vpop.trf.xlu0
    %v667 = vpop.trf.xlu0
    %v668 = vpop.trf.xlu0
    %v669 = vpop.trf.xlu0
    %v670 = vpop.trf.xlu0
    %v671 = vpop.trf.xlu0
    %v672 = vpop.trf.xlu0
    %v673 = vpop.trf.xlu0
    %674 = vxpose.xlu0.b32.start [1/16] %v634, 128
    %675 = vxpose.xlu0.b32.cont [2/16] %v635, 128
    %676 = vxpose.xlu0.b32.cont [3/16] %v636, 128
    %677 = vxpose.xlu0.b32.cont [4/16] 0.0, 128
    %678 = vxpose.xlu0.b32.cont [5/16] 0.0, 128
    %679 = vxpose.xlu0.b32.cont [6/16] 0.0, 128
    %680 = vxpose.xlu0.b32.cont [7/16] 0.0, 128
    %681 = vxpose.xlu0.b32.cont [8/16] 0.0, 128
    %682 = vxpose.xlu0.b32.cont [9/16] 0.0, 128
    %683 = vxpose.xlu0.b32.cont [10/16] 0.0, 128
    %684 = vxpose.xlu0.b32.cont [11/16] 0.0, 128
    %685 = vxpose.xlu0.b32.cont [12/16] 0.0, 128
    %686 = vxpose.xlu0.b32.cont [13/16] 0.0, 128
    %687 = vxpose.xlu0.b32.cont [14/16] 0.0, 128
    %688 = vxpose.xlu0.b32.cont [15/16] 0.0, 128
    %689 = vxpose.xlu0.b32.end [16/16] 0.0, 128
    %v690 = vpop.trf.xlu0
    %v691 = vpop.trf.xlu0
    %v692 = vpop.trf.xlu0
    %v693 = vpop.trf.xlu0
    %v694 = vpop.trf.xlu0
    %v695 = vpop.trf.xlu0
    %v696 = vpop.trf.xlu0
    %v697 = vpop.trf.xlu0
    %v698 = vpop.trf.xlu0
    %v699 = vpop.trf.xlu0
    %v700 = vpop.trf.xlu0
    %v701 = vpop.trf.xlu0
    %v702 = vpop.trf.xlu0
    %v703 = vpop.trf.xlu0
    %v704 = vpop.trf.xlu0
    %v705 = vpop.trf.xlu0
    %vm706 = vcmask 195584
    %v708 = vsel %vm706, %v658, 0
    %v711 = vsel %vm706, %v659, 0
    %v714 = vsel %vm706, %v690, 0
    %v717 = vsel %vm706, %v691, 0
    %719 = vmatprep.subr.mxu0 0.0
    %720 = vmatpush1.msra.mxu0 0.0
    %721 = vmatprep.subr.mxu0 0.0
    %722 = vmatpush1.msra.mxu0 0.0
    %723 = vmatprep.subr.mxu0 0.0
    %724 = vmatpush1.msra.mxu0 0.0
    %725 = vmatprep.subr.mxu0 0.0
    %726 = vmatpush1.msra.mxu0 0.0
    %727 = vmatprep.subr.mxu0 0.0
    %728 = vmatpush1.msra.mxu0 0.0
    %729 = vmatprep.subr.mxu0 0.0
    %730 = vmatpush1.msra.mxu0 0.0
    %731 = vmatprep.subr.mxu0 0.0
    %732 = vmatpush1.msra.mxu0 0.0
    %733 = vmatprep.subr.mxu0 0.0
    %734 = vmatpush1.msra.mxu0 0.0
    %735 = vmatprep.subr.mxu0 0.0
    %736 = vmatpush1.msra.mxu0 0.0
    %737 = vmatprep.subr.mxu0 0.0
    %738 = vmatpush1.msra.mxu0 0.0
    %739 = vmatprep.subr.mxu0 0.0
    %740 = vmatpush1.msra.mxu0 0.0
    %741 = vmatprep.subr.mxu0 0.0
    %742 = vmatpush1.msra.mxu0 0.0
    %743 = vmatprep.subr.mxu0 0.0
    %744 = vmatpush1.msra.mxu0 0.0
    %745 = vmatprep.subr.mxu0 0.0
    %746 = vmatpush1.msra.mxu0 %v639
    %747 = vmatprep.subr.mxu0 0.0
    %748 = vmatpush1.msra.mxu0 %v638
    %749 = vmatprep.subr.mxu0 0.0
    %750 = vmatpush1.msra.mxu0 %v637
    %751 = vmatprep.subr.mxu0 0.0
    %752 = vmatpush2.msra.mxu0 0.0
    %753 = vmatprep.subr.mxu0 0.0
    %754 = vmatpush2.msra.mxu0 0.0
    %755 = vmatprep.subr.mxu0 0.0
    %756 = vmatpush2.msra.mxu0 0.0
    %757 = vmatprep.subr.mxu0 0.0
    %758 = vmatpush2.msra.mxu0 0.0
    %759 = vmatprep.subr.mxu0 0.0
    %760 = vmatpush2.msra.mxu0 0.0
    %761 = vmatprep.subr.mxu0 0.0
    %762 = vmatpush2.msra.mxu0 0.0
    %763 = vmatprep.subr.mxu0 0.0
    %764 = vmatpush2.msra.mxu0 0.0
    %765 = vmatprep.subr.mxu0 0.0
    %766 = vmatpush2.msra.mxu0 0.0
    %767 = vmatprep.subr.mxu0 0.0
    %768 = vmatpush2.msra.mxu0 0.0
    %769 = vmatprep.subr.mxu0 0.0
    %770 = vmatpush2.msra.mxu0 0.0
    %771 = vmatprep.subr.mxu0 0.0
    %772 = vmatpush2.msra.mxu0 0.0
    %773 = vmatprep.subr.mxu0 0.0
    %774 = vmatpush2.msra.mxu0 0.0
    %775 = vmatprep.subr.mxu0 0.0
    %776 = vmatpush2.msra.mxu0 0.0
    %777 = vmatprep.subr.mxu0 0.0
    %778 = vmatpush2.msra.mxu0 0.0
    %779 = vmatprep.subr.mxu0 0.0
    %780 = vmatpush2.msra.mxu0 0.0
    %781 = vmatprep.subr.mxu0 0.0
    %782 = vmatpush2.msra.mxu0 0.0
    %783 = vmatprep.mubr.f32.mxu0 0.0
    %784 = vmatmul.mubr.f32.gmra.mxu0 %v708
    %v785 = vpop.f32.mrf.mxu0
    %v786 = vadd.f32 0.0, %v785
    %v787 = vpop.f32.mrf.mxu0
    %788 = vmatprep.mubr.f32.mxu0 0.0
    %789 = vmatmul.mubr.f32.gmra.mxu0 %v711
    %v790 = vpop.f32.mrf.mxu0
    %v791 = vadd.f32 0.0, %v790
    %v792 = vpop.f32.mrf.mxu0
    %793 = vmatprep.mubr.f32.mxu0 0.0
    %794 = vmatmul.mubr.f32.gmra.mxu0 %v714
    %v795 = vpop.f32.mrf.mxu0
    %v796 = vadd.f32 0.0, %v795
    %v797 = vpop.f32.mrf.mxu0
    %798 = vmatprep.mubr.f32.mxu0 0.0
    %799 = vmatmul.mubr.f32.gmra.mxu0 %v717
    %v800 = vpop.f32.mrf.mxu0
    %v801 = vadd.f32 0.0, %v800
    %v802 = vpop.f32.mrf.mxu0
    %803 = vdwg.mxu0
    %804 = vxpose.xlu0.b32.start [1/16] %v786, 128
    %805 = vxpose.xlu0.b32.cont [2/16] %v791, 128
    %806 = vxpose.xlu0.b32.cont [3/16] 0.0, 128
    %807 = vxpose.xlu0.b32.cont [4/16] 0.0, 128
    %808 = vxpose.xlu0.b32.cont [5/16] 0.0, 128
    %809 = vxpose.xlu0.b32.cont [6/16] 0.0, 128
    %810 = vxpose.xlu0.b32.cont [7/16] 0.0, 128
    %811 = vxpose.xlu0.b32.cont [8/16] 0.0, 128
    %812 = vxpose.xlu0.b32.cont [9/16] 0.0, 128
    %813 = vxpose.xlu0.b32.cont [10/16] 0.0, 128
    %814 = vxpose.xlu0.b32.cont [11/16] 0.0, 128
    %815 = vxpose.xlu0.b32.cont [12/16] 0.0, 128
    %816 = vxpose.xlu0.b32.cont [13/16] 0.0, 128
    %817 = vxpose.xlu0.b32.cont [14/16] 0.0, 128
    %818 = vxpose.xlu0.b32.cont [15/16] 0.0, 128
    %819 = vxpose.xlu0.b32.end [16/16] 0.0, 128
    %v820 = vpop.trf.xlu0
    %v821 = vpop.trf.xlu0
    %v822 = vpop.trf.xlu0
    %v823 = vpop.trf.xlu0
    %v824 = vpop.trf.xlu0
    %v825 = vpop.trf.xlu0
    %v826 = vpop.trf.xlu0
    %v827 = vpop.trf.xlu0
    %v828 = vpop.trf.xlu0
    %v829 = vpop.trf.xlu0
    %v830 = vpop.trf.xlu0
    %v831 = vpop.trf.xlu0
    %v832 = vpop.trf.xlu0
    %v833 = vpop.trf.xlu0
    %v834 = vpop.trf.xlu0
    %v835 = vpop.trf.xlu0
    %836 = vxpose.xlu0.b32.start [1/16] %v796, 128
    %837 = vxpose.xlu0.b32.cont [2/16] %v801, 128
    %838 = vxpose.xlu0.b32.cont [3/16] 0.0, 128
    %839 = vxpose.xlu0.b32.cont [4/16] 0.0, 128
    %840 = vxpose.xlu0.b32.cont [5/16] 0.0, 128
    %841 = vxpose.xlu0.b32.cont [6/16] 0.0, 128
    %842 = vxpose.xlu0.b32.cont [7/16] 0.0, 128
    %843 = vxpose.xlu0.b32.cont [8/16] 0.0, 128
    %844 = vxpose.xlu0.b32.cont [9/16] 0.0, 128
    %845 = vxpose.xlu0.b32.cont [10/16] 0.0, 128
    %846 = vxpose.xlu0.b32.cont [11/16] 0.0, 128
    %847 = vxpose.xlu0.b32.cont [12/16] 0.0, 128
    %848 = vxpose.xlu0.b32.cont [13/16] 0.0, 128
    %849 = vxpose.xlu0.b32.cont [14/16] 0.0, 128
    %850 = vxpose.xlu0.b32.cont [15/16] 0.0, 128
    %851 = vxpose.xlu0.b32.end [16/16] 0.0, 128
    %v852 = vpop.trf.xlu0
    %v853 = vpop.trf.xlu0
    %v854 = vpop.trf.xlu0
    %v855 = vpop.trf.xlu0
    %v856 = vpop.trf.xlu0
    %v857 = vpop.trf.xlu0
    %v858 = vpop.trf.xlu0
    %v859 = vpop.trf.xlu0
    %v860 = vpop.trf.xlu0
    %v861 = vpop.trf.xlu0
    %v862 = vpop.trf.xlu0
    %v863 = vpop.trf.xlu0
    %v864 = vpop.trf.xlu0
    %v865 = vpop.trf.xlu0
    %v866 = vpop.trf.xlu0
    %v867 = vpop.trf.xlu0
    %v869 = vsel %vm557, %v820, 0
    %v872 = vsel %vm557, %v821, 0
    %v875 = vsel %vm557, %v852, 0
    %v878 = vsel %vm557, %v853, 0
    %880 = vmatprep.subr.mxu0 0.0
    %881 = vmatpush1.msra.mxu0 0.0
    %882 = vmatprep.subr.mxu0 0.0
    %883 = vmatpush1.msra.mxu0 0.0
    %884 = vmatprep.subr.mxu0 0.0
    %885 = vmatpush1.msra.mxu0 0.0
    %886 = vmatprep.subr.mxu0 0.0
    %887 = vmatpush1.msra.mxu0 0.0
    %888 = vmatprep.subr.mxu0 0.0
    %889 = vmatpush1.msra.mxu0 0.0
    %890 = vmatprep.subr.mxu0 0.0
    %891 = vmatpush1.msra.mxu0 0.0
    %892 = vmatprep.subr.mxu0 0.0
    %893 = vmatpush1.msra.mxu0 0.0
    %894 = vmatprep.subr.mxu0 0.0
    %895 = vmatpush1.msra.mxu0 0.0
    %896 = vmatprep.subr.mxu0 0.0
    %897 = vmatpush1.msra.mxu0 0.0
    %898 = vmatprep.subr.mxu0 0.0
    %899 = vmatpush1.msra.mxu0 0.0
    %900 = vmatprep.subr.mxu0 0.0
    %901 = vmatpush1.msra.mxu0 0.0
    %902 = vmatprep.subr.mxu0 0.0
    %903 = vmatpush1.msra.mxu0 0.0
    %904 = vmatprep.subr.mxu0 0.0
    %905 = vmatpush1.msra.mxu0 0.0
    %906 = vmatprep.subr.mxu0 0.0
    %907 = vmatpush1.msra.mxu0 0.0
    %908 = vmatprep.subr.mxu0 0.0
    %909 = vmatpush1.msra.mxu0 %v641
    %910 = vmatprep.subr.mxu0 0.0
    %911 = vmatpush1.msra.mxu0 %v640
    %912 = vmatprep.subr.mxu0 0.0
    %913 = vmatpush2.msra.mxu0 0.0
    %914 = vmatprep.subr.mxu0 0.0
    %915 = vmatpush2.msra.mxu0 0.0
    %916 = vmatprep.subr.mxu0 0.0
    %917 = vmatpush2.msra.mxu0 0.0
    %918 = vmatprep.subr.mxu0 0.0
    %919 = vmatpush2.msra.mxu0 0.0
    %920 = vmatprep.subr.mxu0 0.0
    %921 = vmatpush2.msra.mxu0 0.0
    %922 = vmatprep.subr.mxu0 0.0
    %923 = vmatpush2.msra.mxu0 0.0
    %924 = vmatprep.subr.mxu0 0.0
    %925 = vmatpush2.msra.mxu0 0.0
    %926 = vmatprep.subr.mxu0 0.0
    %927 = vmatpush2.msra.mxu0 0.0
    %928 = vmatprep.subr.mxu0 0.0
    %929 = vmatpush2.msra.mxu0 0.0
    %930 = vmatprep.subr.mxu0 0.0
    %931 = vmatpush2.msra.mxu0 0.0
    %932 = vmatprep.subr.mxu0 0.0
    %933 = vmatpush2.msra.mxu0 0.0
    %934 = vmatprep.subr.mxu0 0.0
    %935 = vmatpush2.msra.mxu0 0.0
    %936 = vmatprep.subr.mxu0 0.0
    %937 = vmatpush2.msra.mxu0 0.0
    %938 = vmatprep.subr.mxu0 0.0
    %939 = vmatpush2.msra.mxu0 0.0
    %940 = vmatprep.subr.mxu0 0.0
    %941 = vmatpush2.msra.mxu0 0.0
    %942 = vmatprep.subr.mxu0 0.0
    %943 = vmatpush2.msra.mxu0 0.0
    %944 = vmatprep.mubr.f32.mxu0 0.0
    %945 = vmatmul.mubr.f32.gmra.mxu0 %v869
    %v946 = vpop.f32.mrf.mxu0
    %v947 = vadd.f32 0.0, %v946
    %v948 = vpop.f32.mrf.mxu0
    %949 = vmatprep.mubr.f32.mxu0 0.0
    %950 = vmatmul.mubr.f32.gmra.mxu0 %v872
    %v951 = vpop.f32.mrf.mxu0
    %v952 = vadd.f32 0.0, %v951
    %v953 = vpop.f32.mrf.mxu0
    %954 = vmatprep.mubr.f32.mxu0 0.0
    %955 = vmatmul.mubr.f32.gmra.mxu0 %v875
    %v956 = vpop.f32.mrf.mxu0
    %v957 = vadd.f32 0.0, %v956
    %v958 = vpop.f32.mrf.mxu0
    %959 = vmatprep.mubr.f32.mxu0 0.0
    %960 = vmatmul.mubr.f32.gmra.mxu0 %v878
    %v961 = vpop.f32.mrf.mxu0
    %v962 = vadd.f32 0.0, %v961
    %v963 = vpop.f32.mrf.mxu0
    %964 = vdwg.mxu0
    %vm965 = vcmask 64512
    %v966 = vsel %vm965, %v947, 0.0
    %967 = vadd.xlane.f32.xlu0 %v966
    %v968 = vpop.xlane.xlu0 %967
    %v969 = vsel %vm965, %v952, 0.0
    %970 = vadd.xlane.f32.xlu0 %v969
    %v971 = vpop.xlane.xlu0 %970
    %v972 = vsel %vm965, %v957, 0.0
    %973 = vadd.xlane.f32.xlu0 %v972
    %v974 = vpop.xlane.xlu0 %973
    %v975 = vsel %vm965, %v962, 0.0
    %976 = vadd.xlane.f32.xlu0 %v975
    %v977 = vpop.xlane.xlu0 %976
    %v978 = vrcp.pop 8.0
    %v979 = vmul.f32 %v968, %v978
    %v980 = vmul.f32 %v971, %v978
    %v981 = vmul.f32 %v974, %v978
    %v982 = vmul.f32 %v977, %v978
    %v983 = vsub.f32 %v947, %v979
    %v984 = vsub.f32 %v952, %v980
    %v985 = vsub.f32 %v957, %v981
    %v986 = vsub.f32 %v962, %v982
    %v987 = vmul.f32 %v983, %v983
    %v988 = vmul.f32 %v984, %v984
    %v989 = vmul.f32 %v985, %v985
    %v990 = vmul.f32 %v986, %v986
    %v991 = vsel %vm965, %v987, 0.0
    %992 = vadd.xlane.f32.xlu0 %v991
    %v993 = vpop.xlane.xlu0 %992
    %v994 = vsel %vm965, %v988, 0.0
    %995 = vadd.xlane.f32.xlu0 %v994
    %v996 = vpop.xlane.xlu0 %995
    %v997 = vsel %vm965, %v989, 0.0
    %998 = vadd.xlane.f32.xlu0 %v997
    %v999 = vpop.xlane.xlu0 %998
    %v1000 = vsel %vm965, %v990, 0.0
    %1001 = vadd.xlane.f32.xlu0 %v1000
    %v1002 = vpop.xlane.xlu0 %1001
    %v1003 = vmul.f32 %v993, %v978
    %v1004 = vmul.f32 %v996, %v978
    %v1005 = vmul.f32 %v999, %v978
    %v1006 = vmul.f32 %v1002, %v978
    %v1007 = vadd.f32 %v1003, 1e-05
    %v1008 = vadd.f32 %v1004, 1e-05
    %v1009 = vadd.f32 %v1005, 1e-05
    %v1010 = vadd.f32 %v1006, 1e-05
    %v1011 = vrsqrt.pop %v1007
    %v1012 = vrsqrt.pop %v1008
    %v1013 = vrsqrt.pop %v1009
    %v1014 = vrsqrt.pop %v1010
    %v1015 = vmul.f32 %v983, %v1011
    %v1016 = vmul.f32 %v984, %v1012
    %v1017 = vmul.f32 %v985, %v1013
    %v1018 = vmul.f32 %v986, %v1014
    %1019 = vxpose.xlu0.b32.start [1/16] %v1015, 128
    %1020 = vxpose.xlu0.b32.cont [2/16] %v1016, 128
    %1021 = vxpose.xlu0.b32.cont [3/16] 0.0, 128
    %1022 = vxpose.xlu0.b32.cont [4/16] 0.0, 128
    %1023 = vxpose.xlu0.b32.cont [5/16] 0.0, 128
    %1024 = vxpose.xlu0.b32.cont [6/16] 0.0, 128
    %1025 = vxpose.xlu0.b32.cont [7/16] 0.0, 128
    %1026 = vxpose.xlu0.b32.cont [8/16] 0.0, 128
    %1027 = vxpose.xlu0.b32.cont [9/16] 0.0, 128
    %1028 = vxpose.xlu0.b32.cont [10/16] 0.0, 128
    %1029 = vxpose.xlu0.b32.cont [11/16] 0.0, 128
    %1030 = vxpose.xlu0.b32.cont [12/16] 0.0, 128
    %1031 = vxpose.xlu0.b32.cont [13/16] 0.0, 128
    %1032 = vxpose.xlu0.b32.cont [14/16] 0.0, 128
    %1033 = vxpose.xlu0.b32.cont [15/16] 0.0, 128
    %1034 = vxpose.xlu0.b32.end [16/16] 0.0, 128
    %v1035 = vpop.trf.xlu0
    %v1036 = vpop.trf.xlu0
    %v1037 = vpop.trf.xlu0
    %v1038 = vpop.trf.xlu0
    %v1039 = vpop.trf.xlu0
    %v1040 = vpop.trf.xlu0
    %v1041 = vpop.trf.xlu0
    %v1042 = vpop.trf.xlu0
    %v1043 = vpop.trf.xlu0
    %v1044 = vpop.trf.xlu0
    %v1045 = vpop.trf.xlu0
    %v1046 = vpop.trf.xlu0
    %v1047 = vpop.trf.xlu0
    %v1048 = vpop.trf.xlu0
    %v1049 = vpop.trf.xlu0
    %v1050 = vpop.trf.xlu0
    %1051 = vxpose.xlu0.b32.start [1/16] %v1017, 128
    %1052 = vxpose.xlu0.b32.cont [2/16] %v1018, 128
    %1053 = vxpose.xlu0.b32.cont [3/16] 0.0, 128
    %1054 = vxpose.xlu0.b32.cont [4/16] 0.0, 128
    %1055 = vxpose.xlu0.b32.cont [5/16] 0.0, 128
    %1056 = vxpose.xlu0.b32.cont [6/16] 0.0, 128
    %1057 = vxpose.xlu0.b32.cont [7/16] 0.0, 128
    %1058 = vxpose.xlu0.b32.cont [8/16] 0.0, 128
    %1059 = vxpose.xlu0.b32.cont [9/16] 0.0, 128
    %1060 = vxpose.xlu0.b32.cont [10/16] 0.0, 128
    %1061 = vxpose.xlu0.b32.cont [11/16] 0.0, 128
    %1062 = vxpose.xlu0.b32.cont [12/16] 0.0, 128
    %1063 = vxpose.xlu0.b32.cont [13/16] 0.0, 128
    %1064 = vxpose.xlu0.b32.cont [14/16] 0.0, 128
    %1065 = vxpose.xlu0.b32.cont [15/16] 0.0, 128
    %1066 = vxpose.xlu0.b32.end [16/16] 0.0, 128
    %v1067 = vpop.trf.xlu0
    %v1068 = vpop.trf.xlu0
    %v1069 = vpop.trf.xlu0
    %v1070 = vpop.trf.xlu0
    %v1071 = vpop.trf.xlu0
    %v1072 = vpop.trf.xlu0
    %v1073 = vpop.trf.xlu0
    %v1074 = vpop.trf.xlu0
    %v1075 = vpop.trf.xlu0
    %v1076 = vpop.trf.xlu0
    %v1077 = vpop.trf.xlu0
    %v1078 = vpop.trf.xlu0
    %v1079 = vpop.trf.xlu0
    %v1080 = vpop.trf.xlu0
    %v1081 = vpop.trf.xlu0
    %v1082 = vpop.trf.xlu0
    %v1083 = vld [vmem:[#allocation5 + $0x68] sm:$0xff]
    %v1084 = vld [vmem:[#allocation5 + $0x70] sm:$0xff]
    %v1085 = vld [vmem:[#allocation7] sm:$0x1]
    %v1086 = vlaneseq
    %v1087 = vshrl.u32 %v1086, 7
    %v1088 = vsub.s32 0, %v1087
    %v1089 = vrot.slane %v1085, %v1088
    %v1092 = vrot.slane %v1067, 7
    %vm1093 = vcmask 1041409
    %v1094 = vsel %vm1093, %v1092, %v1035
    %v1095 = vsel %vm557, %v1094, 0
    %1097 = vmatprep.subr.mxu0 0.0
    %1098 = vmatpush1.msra.mxu0 0.0
    %1099 = vmatprep.subr.mxu0 0.0
    %1100 = vmatpush1.msra.mxu0 0.0
    %1101 = vmatprep.subr.mxu0 0.0
    %1102 = vmatpush1.msra.mxu0 0.0
    %1103 = vmatprep.subr.mxu0 0.0
    %1104 = vmatpush1.msra.mxu0 0.0
    %1105 = vmatprep.subr.mxu0 0.0
    %1106 = vmatpush1.msra.mxu0 0.0
    %1107 = vmatprep.subr.mxu0 0.0
    %1108 = vmatpush1.msra.mxu0 0.0
    %1109 = vmatprep.subr.mxu0 0.0
    %1110 = vmatpush1.msra.mxu0 0.0
    %1111 = vmatprep.subr.mxu0 0.0
    %1112 = vmatpush1.msra.mxu0 0.0
    %1113 = vmatprep.subr.mxu0 0.0
    %1114 = vmatpush1.msra.mxu0 0.0
    %1115 = vmatprep.subr.mxu0 0.0
    %1116 = vmatpush1.msra.mxu0 0.0
    %1117 = vmatprep.subr.mxu0 0.0
    %1118 = vmatpush1.msra.mxu0 0.0
    %1119 = vmatprep.subr.mxu0 0.0
    %1120 = vmatpush1.msra.mxu0 0.0
    %1121 = vmatprep.subr.mxu0 0.0
    %1122 = vmatpush1.msra.mxu0 0.0
    %1123 = vmatprep.subr.mxu0 0.0
    %1124 = vmatpush1.msra.mxu0 0.0
    %1125 = vmatprep.subr.mxu0 0.0
    %1126 = vmatpush1.msra.mxu0 %v1084
    %1127 = vmatprep.subr.mxu0 0.0
    %1128 = vmatpush1.msra.mxu0 %v1083
    %1129 = vmatprep.subr.mxu0 0.0
    %1130 = vmatpush2.msra.mxu0 0.0
    %1131 = vmatprep.subr.mxu0 0.0
    %1132 = vmatpush2.msra.mxu0 0.0
    %1133 = vmatprep.subr.mxu0 0.0
    %1134 = vmatpush2.msra.mxu0 0.0
    %1135 = vmatprep.subr.mxu0 0.0
    %1136 = vmatpush2.msra.mxu0 0.0
    %1137 = vmatprep.subr.mxu0 0.0
    %1138 = vmatpush2.msra.mxu0 0.0
    %1139 = vmatprep.subr.mxu0 0.0
    %1140 = vmatpush2.msra.mxu0 0.0
    %1141 = vmatprep.subr.mxu0 0.0
    %1142 = vmatpush2.msra.mxu0 0.0
    %1143 = vmatprep.subr.mxu0 0.0
    %1144 = vmatpush2.msra.mxu0 0.0
    %1145 = vmatprep.subr.mxu0 0.0
    %1146 = vmatpush2.msra.mxu0 0.0
    %1147 = vmatprep.subr.mxu0 0.0
    %1148 = vmatpush2.msra.mxu0 0.0
    %1149 = vmatprep.subr.mxu0 0.0
    %1150 = vmatpush2.msra.mxu0 0.0
    %1151 = vmatprep.subr.mxu0 0.0
    %1152 = vmatpush2.msra.mxu0 0.0
    %1153 = vmatprep.subr.mxu0 0.0
    %1154 = vmatpush2.msra.mxu0 0.0
    %1155 = vmatprep.subr.mxu0 0.0
    %1156 = vmatpush2.msra.mxu0 0.0
    %1157 = vmatprep.subr.mxu0 0.0
    %1158 = vmatpush2.msra.mxu0 0.0
    %1159 = vmatprep.subr.mxu0 0.0
    %1160 = vmatpush2.msra.mxu0 0.0
    %1161 = vmatprep.mubr.f32.mxu0 0.0
    %1162 = vmatmul.mubr.f32.gmra.mxu0 %v1095
    %v1163 = vpop.f32.mrf.mxu0
    %v1164 = vadd.f32 %v1089, %v1163
    %v1165 = vpop.f32.mrf.mxu0
    %1166 = vdwg.mxu0
    %v1167 = vmax.f32 %v1164, 0.0
    %v1168 = vrot.slane %v1035, 1
    %v1169 = vsel %vm1093, %v1067, %v1168
    %v1170 = vsel %vm557, %v1169, 0
    %1172 = vmatprep.subr.mxu0 0.0
    %1173 = vmatpush1.msra.mxu0 0.0
    %1174 = vmatprep.subr.mxu0 0.0
    %1175 = vmatpush1.msra.mxu0 0.0
    %1176 = vmatprep.subr.mxu0 0.0
    %1177 = vmatpush1.msra.mxu0 0.0
    %1178 = vmatprep.subr.mxu0 0.0
    %1179 = vmatpush1.msra.mxu0 0.0
    %1180 = vmatprep.subr.mxu0 0.0
    %1181 = vmatpush1.msra.mxu0 0.0
    %1182 = vmatprep.subr.mxu0 0.0
    %1183 = vmatpush1.msra.mxu0 0.0
    %1184 = vmatprep.subr.mxu0 0.0
    %1185 = vmatpush1.msra.mxu0 0.0
    %1186 = vmatprep.subr.mxu0 0.0
    %1187 = vmatpush1.msra.mxu0 0.0
    %1188 = vmatprep.subr.mxu0 0.0
    %1189 = vmatpush1.msra.mxu0 0.0
    %1190 = vmatprep.subr.mxu0 0.0
    %1191 = vmatpush1.msra.mxu0 0.0
    %1192 = vmatprep.subr.mxu0 0.0
    %1193 = vmatpush1.msra.mxu0 0.0
    %1194 = vmatprep.subr.mxu0 0.0
    %1195 = vmatpush1.msra.mxu0 0.0
    %1196 = vmatprep.subr.mxu0 0.0
    %1197 = vmatpush1.msra.mxu0 0.0
    %1198 = vmatprep.subr.mxu0 0.0
    %1199 = vmatpush1.msra.mxu0 0.0
    %1200 = vmatprep.subr.mxu0 0.0
    %1201 = vmatpush1.msra.mxu0 %v1084
    %1202 = vmatprep.subr.mxu0 0.0
    %1203 = vmatpush1.msra.mxu0 %v1083
    %1204 = vmatprep.subr.mxu0 0.0
    %1205 = vmatpush2.msra.mxu0 0.0
    %1206 = vmatprep.subr.mxu0 0.0
    %1207 = vmatpush2.msra.mxu0 0.0
    %1208 = vmatprep.subr.mxu0 0.0
    %1209 = vmatpush2.msra.mxu0 0.0
    %1210 = vmatprep.subr.mxu0 0.0
    %1211 = vmatpush2.msra.mxu0 0.0
    %1212 = vmatprep.subr.mxu0 0.0
    %1213 = vmatpush2.msra.mxu0 0.0
    %1214 = vmatprep.subr.mxu0 0.0
    %1215 = vmatpush2.msra.mxu0 0.0
    %1216 = vmatprep.subr.mxu0 0.0
    %1217 = vmatpush2.msra.mxu0 0.0
    %1218 = vmatprep.subr.mxu0 0.0
    %1219 = vmatpush2.msra.mxu0 0.0
    %1220 = vmatprep.subr.mxu0 0.0
    %1221 = vmatpush2.msra.mxu0 0.0
    %1222 = vmatprep.subr.mxu0 0.0
    %1223 = vmatpush2.msra.mxu0 0.0
    %1224 = vmatprep.subr.mxu0 0.0
    %1225 = vmatpush2.msra.mxu0 0.0
    %1226 = vmatprep.subr.mxu0 0.0
    %1227 = vmatpush2.msra.mxu0 0.0
    %1228 = vmatprep.subr.mxu0 0.0
    %1229 = vmatpush2.msra.mxu0 0.0
    %1230 = vmatprep.subr.mxu0 0.0
    %1231 = vmatpush2.msra.mxu0 0.0
    %1232 = vmatprep.subr.mxu0 0.0
    %1233 = vmatpush2.msra.mxu0 0.0
    %1234 = vmatprep.subr.mxu0 0.0
    %1235 = vmatpush2.msra.mxu0 0.0
    %1236 = vmatprep.mubr.f32.mxu0 0.0
    %1237 = vmatmul.mubr.f32.gmra.mxu0 %v1170
    %v1238 = vpop.f32.mrf.mxu0
    %v1239 = vadd.f32 %v1089, %v1238
    %v1240 = vpop.f32.mrf.mxu0
    %1241 = vdwg.mxu0
    %v1242 = vmax.f32 %v1239, 0.0
    %v1243 = vrot.slane %v1035, 2
    %v1244 = vrot.slane %v1067, 1
    %v1245 = vsel %vm1093, %v1244, %v1243
    %v1246 = vsel %vm557, %v1245, 0
    %1248 = vmatprep.subr.mxu0 0.0
    %1249 = vmatpush1.msra.mxu0 0.0
    %1250 = vmatprep.subr.mxu0 0.0
    %1251 = vmatpush1.msra.mxu0 0.0
    %1252 = vmatprep.subr.mxu0 0.0
    %1253 = vmatpush1.msra.mxu0 0.0
    %1254 = vmatprep.subr.mxu0 0.0
    %1255 = vmatpush1.msra.mxu0 0.0
    %1256 = vmatprep.subr.mxu0 0.0
    %1257 = vmatpush1.msra.mxu0 0.0
    %1258 = vmatprep.subr.mxu0 0.0
    %1259 = vmatpush1.msra.mxu0 0.0
    %1260 = vmatprep.subr.mxu0 0.0
    %1261 = vmatpush1.msra.mxu0 0.0
    %1262 = vmatprep.subr.mxu0 0.0
    %1263 = vmatpush1.msra.mxu0 0.0
    %1264 = vmatprep.subr.mxu0 0.0
    %1265 = vmatpush1.msra.mxu0 0.0
    %1266 = vmatprep.subr.mxu0 0.0
    %1267 = vmatpush1.msra.mxu0 0.0
    %1268 = vmatprep.subr.mxu0 0.0
    %1269 = vmatpush1.msra.mxu0 0.0
    %1270 = vmatprep.subr.mxu0 0.0
    %1271 = vmatpush1.msra.mxu0 0.0
    %1272 = vmatprep.subr.mxu0 0.0
    %1273 = vmatpush1.msra.mxu0 0.0
    %1274 = vmatprep.subr.mxu0 0.0
    %1275 = vmatpush1.msra.mxu0 0.0
    %1276 = vmatprep.subr.mxu0 0.0
    %1277 = vmatpush1.msra.mxu0 %v1084
    %1278 = vmatprep.subr.mxu0 0.0
    %1279 = vmatpush1.msra.mxu0 %v1083
    %1280 = vmatprep.subr.mxu0 0.0
    %1281 = vmatpush2.msra.mxu0 0.0
    %1282 = vmatprep.subr.mxu0 0.0
    %1283 = vmatpush2.msra.mxu0 0.0
    %1284 = vmatprep.subr.mxu0 0.0
    %1285 = vmatpush2.msra.mxu0 0.0
    %1286 = vmatprep.subr.mxu0 0.0
    %1287 = vmatpush2.msra.mxu0 0.0
    %1288 = vmatprep.subr.mxu0 0.0
    %1289 = vmatpush2.msra.mxu0 0.0
    %1290 = vmatprep.subr.mxu0 0.0
    %1291 = vmatpush2.msra.mxu0 0.0
    %1292 = vmatprep.subr.mxu0 0.0
    %1293 = vmatpush2.msra.mxu0 0.0
    %1294 = vmatprep.subr.mxu0 0.0
    %1295 = vmatpush2.msra.mxu0 0.0
    %1296 = vmatprep.subr.mxu0 0.0
    %1297 = vmatpush2.msra.mxu0 0.0
    %1298 = vmatprep.subr.mxu0 0.0
    %1299 = vmatpush2.msra.mxu0 0.0
    %1300 = vmatprep.subr.mxu0 0.0
    %1301 = vmatpush2.msra.mxu0 0.0
    %1302 = vmatprep.subr.mxu0 0.0
    %1303 = vmatpush2.msra.mxu0 0.0
    %1304 = vmatprep.subr.mxu0 0.0
    %1305 = vmatpush2.msra.mxu0 0.0
    %1306 = vmatprep.subr.mxu0 0.0
    %1307 = vmatpush2.msra.mxu0 0.0
    %1308 = vmatprep.subr.mxu0 0.0
    %1309 = vmatpush2.msra.mxu0 0.0
    %1310 = vmatprep.subr.mxu0 0.0
    %1311 = vmatpush2.msra.mxu0 0.0
    %1312 = vmatprep.mubr.f32.mxu0 0.0
    %1313 = vmatmul.mubr.f32.gmra.mxu0 %v1246
    %v1314 = vpop.f32.mrf.mxu0
    %v1315 = vadd.f32 %v1089, %v1314
    %v1316 = vpop.f32.mrf.mxu0
    %1317 = vdwg.mxu0
    %v1318 = vmax.f32 %v1315, 0.0
    %v1319 = vrot.slane %v1035, 3
    %v1320 = vrot.slane %v1067, 2
    %v1321 = vsel %vm1093, %v1320, %v1319
    %v1322 = vsel %vm557, %v1321, 0
    %1324 = vmatprep.subr.mxu0 0.0
    %1325 = vmatpush1.msra.mxu0 0.0
    %1326 = vmatprep.subr.mxu0 0.0
    %1327 = vmatpush1.msra.mxu0 0.0
    %1328 = vmatprep.subr.mxu0 0.0
    %1329 = vmatpush1.msra.mxu0 0.0
    %1330 = vmatprep.subr.mxu0 0.0
    %1331 = vmatpush1.msra.mxu0 0.0
    %1332 = vmatprep.subr.mxu0 0.0
    %1333 = vmatpush1.msra.mxu0 0.0
    %1334 = vmatprep.subr.mxu0 0.0
    %1335 = vmatpush1.msra.mxu0 0.0
    %1336 = vmatprep.subr.mxu0 0.0
    %1337 = vmatpush1.msra.mxu0 0.0
    %1338 = vmatprep.subr.mxu0 0.0
    %1339 = vmatpush1.msra.mxu0 0.0
    %1340 = vmatprep.subr.mxu0 0.0
    %1341 = vmatpush1.msra.mxu0 0.0
    %1342 = vmatprep.subr.mxu0 0.0
    %1343 = vmatpush1.msra.mxu0 0.0
    %1344 = vmatprep.subr.mxu0 0.0
    %1345 = vmatpush1.msra.mxu0 0.0
    %1346 = vmatprep.subr.mxu0 0.0
    %1347 = vmatpush1.msra.mxu0 0.0
    %1348 = vmatprep.subr.mxu0 0.0
    %1349 = vmatpush1.msra.mxu0 0.0
    %1350 = vmatprep.subr.mxu0 0.0
    %1351 = vmatpush1.msra.mxu0 0.0
    %1352 = vmatprep.subr.mxu0 0.0
    %1353 = vmatpush1.msra.mxu0 %v1084
    %1354 = vmatprep.subr.mxu0 0.0
    %1355 = vmatpush1.msra.mxu0 %v1083
    %1356 = vmatprep.subr.mxu0 0.0
    %1357 = vmatpush2.msra.mxu0 0.0
    %1358 = vmatprep.subr.mxu0 0.0
    %1359 = vmatpush2.msra.mxu0 0.0
    %1360 = vmatprep.subr.mxu0 0.0
    %1361 = vmatpush2.msra.mxu0 0.0
    %1362 = vmatprep.subr.mxu0 0.0
    %1363 = vmatpush2.msra.mxu0 0.0
    %1364 = vmatprep.subr.mxu0 0.0
    %1365 = vmatpush2.msra.mxu0 0.0
    %1366 = vmatprep.subr.mxu0 0.0
    %1367 = vmatpush2.msra.mxu0 0.0
    %1368 = vmatprep.subr.mxu0 0.0
    %1369 = vmatpush2.msra.mxu0 0.0
    %1370 = vmatprep.subr.mxu0 0.0
    %1371 = vmatpush2.msra.mxu0 0.0
    %1372 = vmatprep.subr.mxu0 0.0
    %1373 = vmatpush2.msra.mxu0 0.0
    %1374 = vmatprep.subr.mxu0 0.0
    %1375 = vmatpush2.msra.mxu0 0.0
    %1376 = vmatprep.subr.mxu0 0.0
    %1377 = vmatpush2.msra.mxu0 0.0
    %1378 = vmatprep.subr.mxu0 0.0
    %1379 = vmatpush2.msra.mxu0 0.0
    %1380 = vmatprep.subr.mxu0 0.0
    %1381 = vmatpush2.msra.mxu0 0.0
    %1382 = vmatprep.subr.mxu0 0.0
    %1383 = vmatpush2.msra.mxu0 0.0
    %1384 = vmatprep.subr.mxu0 0.0
    %1385 = vmatpush2.msra.mxu0 0.0
    %1386 = vmatprep.subr.mxu0 0.0
    %1387 = vmatpush2.msra.mxu0 0.0
    %1388 = vmatprep.mubr.f32.mxu0 0.0
    %1389 = vmatmul.mubr.f32.gmra.mxu0 %v1322
    %v1390 = vpop.f32.mrf.mxu0
    %v1391 = vadd.f32 %v1089, %v1390
    %v1392 = vpop.f32.mrf.mxu0
    %1393 = vdwg.mxu0
    %v1394 = vmax.f32 %v1391, 0.0
    %v1395 = vrot.slane %v1035, 4
    %v1396 = vrot.slane %v1067, 3
    %v1397 = vsel %vm1093, %v1396, %v1395
    %v1398 = vsel %vm557, %v1397, 0
    %1400 = vmatprep.subr.mxu0 0.0
    %1401 = vmatpush1.msra.mxu0 0.0
    %1402 = vmatprep.subr.mxu0 0.0
    %1403 = vmatpush1.msra.mxu0 0.0
    %1404 = vmatprep.subr.mxu0 0.0
    %1405 = vmatpush1.msra.mxu0 0.0
    %1406 = vmatprep.subr.mxu0 0.0
    %1407 = vmatpush1.msra.mxu0 0.0
    %1408 = vmatprep.subr.mxu0 0.0
    %1409 = vmatpush1.msra.mxu0 0.0
    %1410 = vmatprep.subr.mxu0 0.0
    %1411 = vmatpush1.msra.mxu0 0.0
    %1412 = vmatprep.subr.mxu0 0.0
    %1413 = vmatpush1.msra.mxu0 0.0
    %1414 = vmatprep.subr.mxu0 0.0
    %1415 = vmatpush1.msra.mxu0 0.0
    %1416 = vmatprep.subr.mxu0 0.0
    %1417 = vmatpush1.msra.mxu0 0.0
    %1418 = vmatprep.subr.mxu0 0.0
    %1419 = vmatpush1.msra.mxu0 0.0
    %1420 = vmatprep.subr.mxu0 0.0
    %1421 = vmatpush1.msra.mxu0 0.0
    %1422 = vmatprep.subr.mxu0 0.0
    %1423 = vmatpush1.msra.mxu0 0.0
    %1424 = vmatprep.subr.mxu0 0.0
    %1425 = vmatpush1.msra.mxu0 0.0
    %1426 = vmatprep.subr.mxu0 0.0
    %1427 = vmatpush1.msra.mxu0 0.0
    %1428 = vmatprep.subr.mxu0 0.0
    %1429 = vmatpush1.msra.mxu0 %v1084
    %1430 = vmatprep.subr.mxu0 0.0
    %1431 = vmatpush1.msra.mxu0 %v1083
    %1432 = vmatprep.subr.mxu0 0.0
    %1433 = vmatpush2.msra.mxu0 0.0
    %1434 = vmatprep.subr.mxu0 0.0
    %1435 = vmatpush2.msra.mxu0 0.0
    %1436 = vmatprep.subr.mxu0 0.0
    %1437 = vmatpush2.msra.mxu0 0.0
    %1438 = vmatprep.subr.mxu0 0.0
    %1439 = vmatpush2.msra.mxu0 0.0
    %1440 = vmatprep.subr.mxu0 0.0
    %1441 = vmatpush2.msra.mxu0 0.0
    %1442 = vmatprep.subr.mxu0 0.0
    %1443 = vmatpush2.msra.mxu0 0.0
    %1444 = vmatprep.subr.mxu0 0.0
    %1445 = vmatpush2.msra.mxu0 0.0
    %1446 = vmatprep.subr.mxu0 0.0
    %1447 = vmatpush2.msra.mxu0 0.0
    %1448 = vmatprep.subr.mxu0 0.0
    %1449 = vmatpush2.msra.mxu0 0.0
    %1450 = vmatprep.subr.mxu0 0.0
    %1451 = vmatpush2.msra.mxu0 0.0
    %1452 = vmatprep.subr.mxu0 0.0
    %1453 = vmatpush2.msra.mxu0 0.0
    %1454 = vmatprep.subr.mxu0 0.0
    %1455 = vmatpush2.msra.mxu0 0.0
    %1456 = vmatprep.subr.mxu0 0.0
    %1457 = vmatpush2.msra.mxu0 0.0
    %1458 = vmatprep.subr.mxu0 0.0
    %1459 = vmatpush2.msra.mxu0 0.0
    %1460 = vmatprep.subr.mxu0 0.0
    %1461 = vmatpush2.msra.mxu0 0.0
    %1462 = vmatprep.subr.mxu0 0.0
    %1463 = vmatpush2.msra.mxu0 0.0
    %1464 = vmatprep.mubr.f32.mxu0 0.0
    %1465 = vmatmul.mubr.f32.gmra.mxu0 %v1398
    %v1466 = vpop.f32.mrf.mxu0
    %v1467 = vadd.f32 %v1089, %v1466
    %v1468 = vpop.f32.mrf.mxu0
    %1469 = vdwg.mxu0
    %v1470 = vmax.f32 %v1467, 0.0
    %v1471 = vrot.slane %v1035, 5
    %v1472 = vrot.slane %v1067, 4
    %v1473 = vsel %vm1093, %v1472, %v1471
    %v1474 = vsel %vm557, %v1473, 0
    %1476 = vmatprep.subr.mxu0 0.0
    %1477 = vmatpush1.msra.mxu0 0.0
    %1478 = vmatprep.subr.mxu0 0.0
    %1479 = vmatpush1.msra.mxu0 0.0
    %1480 = vmatprep.subr.mxu0 0.0
    %1481 = vmatpush1.msra.mxu0 0.0
    %1482 = vmatprep.subr.mxu0 0.0
    %1483 = vmatpush1.msra.mxu0 0.0
    %1484 = vmatprep.subr.mxu0 0.0
    %1485 = vmatpush1.msra.mxu0 0.0
    %1486 = vmatprep.subr.mxu0 0.0
    %1487 = vmatpush1.msra.mxu0 0.0
    %1488 = vmatprep.subr.mxu0 0.0
    %1489 = vmatpush1.msra.mxu0 0.0
    %1490 = vmatprep.subr.mxu0 0.0
    %1491 = vmatpush1.msra.mxu0 0.0
    %1492 = vmatprep.subr.mxu0 0.0
    %1493 = vmatpush1.msra.mxu0 0.0
    %1494 = vmatprep.subr.mxu0 0.0
    %1495 = vmatpush1.msra.mxu0 0.0
    %1496 = vmatprep.subr.mxu0 0.0
    %1497 = vmatpush1.msra.mxu0 0.0
    %1498 = vmatprep.subr.mxu0 0.0
    %1499 = vmatpush1.msra.mxu0 0.0
    %1500 = vmatprep.subr.mxu0 0.0
    %1501 = vmatpush1.msra.mxu0 0.0
    %1502 = vmatprep.subr.mxu0 0.0
    %1503 = vmatpush1.msra.mxu0 0.0
    %1504 = vmatprep.subr.mxu0 0.0
    %1505 = vmatpush1.msra.mxu0 %v1084
    %1506 = vmatprep.subr.mxu0 0.0
    %1507 = vmatpush1.msra.mxu0 %v1083
    %1508 = vmatprep.subr.mxu0 0.0
    %1509 = vmatpush2.msra.mxu0 0.0
    %1510 = vmatprep.subr.mxu0 0.0
    %1511 = vmatpush2.msra.mxu0 0.0
    %1512 = vmatprep.subr.mxu0 0.0
    %1513 = vmatpush2.msra.mxu0 0.0
    %1514 = vmatprep.subr.mxu0 0.0
    %1515 = vmatpush2.msra.mxu0 0.0
    %1516 = vmatprep.subr.mxu0 0.0
    %1517 = vmatpush2.msra.mxu0 0.0
    %1518 = vmatprep.subr.mxu0 0.0
    %1519 = vmatpush2.msra.mxu0 0.0
    %1520 = vmatprep.subr.mxu0 0.0
    %1521 = vmatpush2.msra.mxu0 0.0
    %1522 = vmatprep.subr.mxu0 0.0
    %1523 = vmatpush2.msra.mxu0 0.0
    %1524 = vmatprep.subr.mxu0 0.0
    %1525 = vmatpush2.msra.mxu0 0.0
    %1526 = vmatprep.subr.mxu0 0.0
    %1527 = vmatpush2.msra.mxu0 0.0
    %1528 = vmatprep.subr.mxu0 0.0
    %1529 = vmatpush2.msra.mxu0 0.0
    %1530 = vmatprep.subr.mxu0 0.0
    %1531 = vmatpush2.msra.mxu0 0.0
    %1532 = vmatprep.subr.mxu0 0.0
    %1533 = vmatpush2.msra.mxu0 0.0
    %1534 = vmatprep.subr.mxu0 0.0
    %1535 = vmatpush2.msra.mxu0 0.0
    %1536 = vmatprep.subr.mxu0 0.0
    %1537 = vmatpush2.msra.mxu0 0.0
    %1538 = vmatprep.subr.mxu0 0.0
    %1539 = vmatpush2.msra.mxu0 0.0
    %1540 = vmatprep.mubr.f32.mxu0 0.0
    %1541 = vmatmul.mubr.f32.gmra.mxu0 %v1474
    %v1542 = vpop.f32.mrf.mxu0
    %v1543 = vadd.f32 %v1089, %v1542
    %v1544 = vpop.f32.mrf.mxu0
    %1545 = vdwg.mxu0
    %v1546 = vmax.f32 %v1543, 0.0
    %v1547 = vrot.slane %v1035, 6
    %v1548 = vrot.slane %v1067, 5
    %v1549 = vsel %vm1093, %v1548, %v1547
    %v1550 = vsel %vm557, %v1549, 0
    %1552 = vmatprep.subr.mxu0 0.0
    %1553 = vmatpush1.msra.mxu0 0.0
    %1554 = vmatprep.subr.mxu0 0.0
    %1555 = vmatpush1.msra.mxu0 0.0
    %1556 = vmatprep.subr.mxu0 0.0
    %1557 = vmatpush1.msra.mxu0 0.0
    %1558 = vmatprep.subr.mxu0 0.0
    %1559 = vmatpush1.msra.mxu0 0.0
    %1560 = vmatprep.subr.mxu0 0.0
    %1561 = vmatpush1.msra.mxu0 0.0
    %1562 = vmatprep.subr.mxu0 0.0
    %1563 = vmatpush1.msra.mxu0 0.0
    %1564 = vmatprep.subr.mxu0 0.0
    %1565 = vmatpush1.msra.mxu0 0.0
    %1566 = vmatprep.subr.mxu0 0.0
    %1567 = vmatpush1.msra.mxu0 0.0
    %1568 = vmatprep.subr.mxu0 0.0
    %1569 = vmatpush1.msra.mxu0 0.0
    %1570 = vmatprep.subr.mxu0 0.0
    %1571 = vmatpush1.msra.mxu0 0.0
    %1572 = vmatprep.subr.mxu0 0.0
    %1573 = vmatpush1.msra.mxu0 0.0
    %1574 = vmatprep.subr.mxu0 0.0
    %1575 = vmatpush1.msra.mxu0 0.0
    %1576 = vmatprep.subr.mxu0 0.0
    %1577 = vmatpush1.msra.mxu0 0.0
    %1578 = vmatprep.subr.mxu0 0.0
    %1579 = vmatpush1.msra.mxu0 0.0
    %1580 = vmatprep.subr.mxu0 0.0
    %1581 = vmatpush1.msra.mxu0 %v1084
    %1582 = vmatprep.subr.mxu0 0.0
    %1583 = vmatpush1.msra.mxu0 %v1083
    %1584 = vmatprep.subr.mxu0 0.0
    %1585 = vmatpush2.msra.mxu0 0.0
    %1586 = vmatprep.subr.mxu0 0.0
    %1587 = vmatpush2.msra.mxu0 0.0
    %1588 = vmatprep.subr.mxu0 0.0
    %1589 = vmatpush2.msra.mxu0 0.0
    %1590 = vmatprep.subr.mxu0 0.0
    %1591 = vmatpush2.msra.mxu0 0.0
    %1592 = vmatprep.subr.mxu0 0.0
    %1593 = vmatpush2.msra.mxu0 0.0
    %1594 = vmatprep.subr.mxu0 0.0
    %1595 = vmatpush2.msra.mxu0 0.0
    %1596 = vmatprep.subr.mxu0 0.0
    %1597 = vmatpush2.msra.mxu0 0.0
    %1598 = vmatprep.subr.mxu0 0.0
    %1599 = vmatpush2.msra.mxu0 0.0
    %1600 = vmatprep.subr.mxu0 0.0
    %1601 = vmatpush2.msra.mxu0 0.0
    %1602 = vmatprep.subr.mxu0 0.0
    %1603 = vmatpush2.msra.mxu0 0.0
    %1604 = vmatprep.subr.mxu0 0.0
    %1605 = vmatpush2.msra.mxu0 0.0
    %1606 = vmatprep.subr.mxu0 0.0
    %1607 = vmatpush2.msra.mxu0 0.0
    %1608 = vmatprep.subr.mxu0 0.0
    %1609 = vmatpush2.msra.mxu0 0.0
    %1610 = vmatprep.subr.mxu0 0.0
    %1611 = vmatpush2.msra.mxu0 0.0
    %1612 = vmatprep.subr.mxu0 0.0
    %1613 = vmatpush2.msra.mxu0 0.0
    %1614 = vmatprep.subr.mxu0 0.0
    %1615 = vmatpush2.msra.mxu0 0.0
    %1616 = vmatprep.mubr.f32.mxu0 0.0
    %1617 = vmatmul.mubr.f32.gmra.mxu0 %v1550
    %v1618 = vpop.f32.mrf.mxu0
    %v1619 = vadd.f32 %v1089, %v1618
    %v1620 = vpop.f32.mrf.mxu0
    %1621 = vdwg.mxu0
    %v1622 = vmax.f32 %v1619, 0.0
    %v1623 = vrot.slane %v1035, 7
    %v1624 = vrot.slane %v1067, 6
    %v1625 = vsel %vm1093, %v1624, %v1623
    %v1626 = vsel %vm557, %v1625, 0
    %1628 = vmatprep.subr.mxu0 0.0
    %1629 = vmatpush1.msra.mxu0 0.0
    %1630 = vmatprep.subr.mxu0 0.0
    %1631 = vmatpush1.msra.mxu0 0.0
    %1632 = vmatprep.subr.mxu0 0.0
    %1633 = vmatpush1.msra.mxu0 0.0
    %1634 = vmatprep.subr.mxu0 0.0
    %1635 = vmatpush1.msra.mxu0 0.0
    %1636 = vmatprep.subr.mxu0 0.0
    %1637 = vmatpush1.msra.mxu0 0.0
    %1638 = vmatprep.subr.mxu0 0.0
    %1639 = vmatpush1.msra.mxu0 0.0
    %1640 = vmatprep.subr.mxu0 0.0
    %1641 = vmatpush1.msra.mxu0 0.0
    %1642 = vmatprep.subr.mxu0 0.0
    %1643 = vmatpush1.msra.mxu0 0.0
    %1644 = vmatprep.subr.mxu0 0.0
    %1645 = vmatpush1.msra.mxu0 0.0
    %1646 = vmatprep.subr.mxu0 0.0
    %1647 = vmatpush1.msra.mxu0 0.0
    %1648 = vmatprep.subr.mxu0 0.0
    %1649 = vmatpush1.msra.mxu0 0.0
    %1650 = vmatprep.subr.mxu0 0.0
    %1651 = vmatpush1.msra.mxu0 0.0
    %1652 = vmatprep.subr.mxu0 0.0
    %1653 = vmatpush1.msra.mxu0 0.0
    %1654 = vmatprep.subr.mxu0 0.0
    %1655 = vmatpush1.msra.mxu0 0.0
    %1656 = vmatprep.subr.mxu0 0.0
    %1657 = vmatpush1.msra.mxu0 %v1084
    %1658 = vmatprep.subr.mxu0 0.0
    %1659 = vmatpush1.msra.mxu0 %v1083
    %1660 = vmatprep.subr.mxu0 0.0
    %1661 = vmatpush2.msra.mxu0 0.0
    %1662 = vmatprep.subr.mxu0 0.0
    %1663 = vmatpush2.msra.mxu0 0.0
    %1664 = vmatprep.subr.mxu0 0.0
    %1665 = vmatpush2.msra.mxu0 0.0
    %1666 = vmatprep.subr.mxu0 0.0
    %1667 = vmatpush2.msra.mxu0 0.0
    %1668 = vmatprep.subr.mxu0 0.0
    %1669 = vmatpush2.msra.mxu0 0.0
    %1670 = vmatprep.subr.mxu0 0.0
    %1671 = vmatpush2.msra.mxu0 0.0
    %1672 = vmatprep.subr.mxu0 0.0
    %1673 = vmatpush2.msra.mxu0 0.0
    %1674 = vmatprep.subr.mxu0 0.0
    %1675 = vmatpush2.msra.mxu0 0.0
    %1676 = vmatprep.subr.mxu0 0.0
    %1677 = vmatpush2.msra.mxu0 0.0
    %1678 = vmatprep.subr.mxu0 0.0
    %1679 = vmatpush2.msra.mxu0 0.0
    %1680 = vmatprep.subr.mxu0 0.0
    %1681 = vmatpush2.msra.mxu0 0.0
    %1682 = vmatprep.subr.mxu0 0.0
    %1683 = vmatpush2.msra.mxu0 0.0
    %1684 = vmatprep.subr.mxu0 0.0
    %1685 = vmatpush2.msra.mxu0 0.0
    %1686 = vmatprep.subr.mxu0 0.0
    %1687 = vmatpush2.msra.mxu0 0.0
    %1688 = vmatprep.subr.mxu0 0.0
    %1689 = vmatpush2.msra.mxu0 0.0
    %1690 = vmatprep.subr.mxu0 0.0
    %1691 = vmatpush2.msra.mxu0 0.0
    %1692 = vmatprep.mubr.f32.mxu0 0.0
    %1693 = vmatmul.mubr.f32.gmra.mxu0 %v1626
    %v1694 = vpop.f32.mrf.mxu0
    %v1695 = vadd.f32 %v1089, %v1694
    %v1696 = vpop.f32.mrf.mxu0
    %1697 = vdwg.mxu0
    %v1698 = vmax.f32 %v1695, 0.0
    %1700 = vrot.lane.b32.xlu0 %v1242, 8
    %v1701 = vpop.permute.xlu0 %1700
    %1704 = vrot.lane.b32.xlu0 %v1318, 16
    %v1705 = vpop.permute.xlu0 %1704
    %1708 = vrot.lane.b32.xlu0 %v1394, 24
    %v1709 = vpop.permute.xlu0 %1708
    %1712 = vrot.lane.b32.xlu0 %v1470, 32
    %v1713 = vpop.permute.xlu0 %1712
    %1716 = vrot.lane.b32.xlu0 %v1546, 40
    %v1717 = vpop.permute.xlu0 %1716
    %1720 = vrot.lane.b32.xlu0 %v1622, 48
    %v1721 = vpop.permute.xlu0 %1720
    %1724 = vrot.lane.b32.xlu0 %v1698, 56
    %v1725 = vpop.permute.xlu0 %1724
    %v1727 = vsel %vm965, %v1167, %v1701
    %v1728 = vsel %vm557, %v1727, %v1705
    %v1729 = vsel %vm706, %v1728, %v1709
    %v1730 = vsel %vm62, %v1729, %v1713
    %vm1731 = vcmask 326656
    %v1732 = vsel %vm1731, %v1730, %v1717
    %vm1733 = vcmask 392192
    %v1734 = vsel %vm1733, %v1732, %v1721
    %vm1735 = vcmask 457728
    %v1736 = vsel %vm1735, %v1734, %v1725
    %v1737 = vld [vmem:[#allocation5 + $0x78] sm:$0xff]
    %v1738 = vld [vmem:[#allocation5 + $0x80] sm:$0xff]
    %v1739 = vld [vmem:[#allocation5 + $0x88] sm:$0xff]
    %v1740 = vld [vmem:[#allocation5 + $0x90] sm:$0xff]
    %v1741 = vld [vmem:[#allocation5 + $0x98] sm:$0xff]
    %v1742 = vld [vmem:[#allocation5 + $0xa0] sm:$0xff]
    %v1743 = vld [vmem:[#allocation5 + $0xa8] sm:$0xff]
    %v1744 = vld [vmem:[#allocation5 + $0xb0] sm:$0xff]
    %v1745 = vld [vmem:[#allocation7 + $0x1] sm:$0x1]
    %v1746 = vlaneseq
    %v1747 = vshrl.u32 %v1746, 7
    %v1748 = vsub.s32 0, %v1747
    %v1749 = vrot.slane %v1745, %v1748
    %vm1750 = vcmask 523264
    %v1752 = vsel %vm1750, %v1736, 0
    %1754 = vmatprep.subr.mxu0 0.0
    %1755 = vmatpush1.msra.mxu0 0.0
    %1756 = vmatprep.subr.mxu0 0.0
    %1757 = vmatpush1.msra.mxu0 0.0
    %1758 = vmatprep.subr.mxu0 0.0
    %1759 = vmatpush1.msra.mxu0 0.0
    %1760 = vmatprep.subr.mxu0 0.0
    %1761 = vmatpush1.msra.mxu0 0.0
    %1762 = vmatprep.subr.mxu0 0.0
    %1763 = vmatpush1.msra.mxu0 0.0
    %1764 = vmatprep.subr.mxu0 0.0
    %1765 = vmatpush1.msra.mxu0 0.0
    %1766 = vmatprep.subr.mxu0 0.0
    %1767 = vmatpush1.msra.mxu0 0.0
    %1768 = vmatprep.subr.mxu0 0.0
    %1769 = vmatpush1.msra.mxu0 0.0
    %1770 = vmatprep.subr.mxu0 0.0
    %1771 = vmatpush1.msra.mxu0 %v1744
    %1772 = vmatprep.subr.mxu0 0.0
    %1773 = vmatpush1.msra.mxu0 %v1743
    %1774 = vmatprep.subr.mxu0 0.0
    %1775 = vmatpush1.msra.mxu0 %v1742
    %1776 = vmatprep.subr.mxu0 0.0
    %1777 = vmatpush1.msra.mxu0 %v1741
    %1778 = vmatprep.subr.mxu0 0.0
    %1779 = vmatpush1.msra.mxu0 %v1740
    %1780 = vmatprep.subr.mxu0 0.0
    %1781 = vmatpush1.msra.mxu0 %v1739
    %1782 = vmatprep.subr.mxu0 0.0
    %1783 = vmatpush1.msra.mxu0 %v1738
    %1784 = vmatprep.subr.mxu0 0.0
    %1785 = vmatpush1.msra.mxu0 %v1737
    %1786 = vmatprep.subr.mxu0 0.0
    %1787 = vmatpush2.msra.mxu0 0.0
    %1788 = vmatprep.subr.mxu0 0.0
    %1789 = vmatpush2.msra.mxu0 0.0
    %1790 = vmatprep.subr.mxu0 0.0
    %1791 = vmatpush2.msra.mxu0 0.0
    %1792 = vmatprep.subr.mxu0 0.0
    %1793 = vmatpush2.msra.mxu0 0.0
    %1794 = vmatprep.subr.mxu0 0.0
    %1795 = vmatpush2.msra.mxu0 0.0
    %1796 = vmatprep.subr.mxu0 0.0
    %1797 = vmatpush2.msra.mxu0 0.0
    %1798 = vmatprep.subr.mxu0 0.0
    %1799 = vmatpush2.msra.mxu0 0.0
    %1800 = vmatprep.subr.mxu0 0.0
    %1801 = vmatpush2.msra.mxu0 0.0
    %1802 = vmatprep.subr.mxu0 0.0
    %1803 = vmatpush2.msra.mxu0 0.0
    %1804 = vmatprep.subr.mxu0 0.0
    %1805 = vmatpush2.msra.mxu0 0.0
    %1806 = vmatprep.subr.mxu0 0.0
    %1807 = vmatpush2.msra.mxu0 0.0
    %1808 = vmatprep.subr.mxu0 0.0
    %1809 = vmatpush2.msra.mxu0 0.0
    %1810 = vmatprep.subr.mxu0 0.0
    %1811 = vmatpush2.msra.mxu0 0.0
    %1812 = vmatprep.subr.mxu0 0.0
    %1813 = vmatpush2.msra.mxu0 0.0
    %1814 = vmatprep.subr.mxu0 0.0
    %1815 = vmatpush2.msra.mxu0 0.0
    %1816 = vmatprep.subr.mxu0 0.0
    %1817 = vmatpush2.msra.mxu0 0.0
    %1818 = vmatprep.mubr.f32.mxu0 0.0
    %1819 = vmatmul.mubr.f32.gmra.mxu0 %v1752
    %v1820 = vpop.f32.mrf.mxu0
    %v1821 = vadd.f32 %v1749, %v1820
    %v1822 = vpop.f32.mrf.mxu0
    %1823 = vdwg.mxu0
    %v1824 = vld [vmem:[#allocation7 + $0x2] sm:$0x1]
    %v1825 = vld [vmem:[#allocation7 + $0x3] sm:$0x1]
    %vm1826 = vcmask 238592
    %v1827 = vsel %vm1826, %v1821, 0.0
    %v1828 = vrot.slane %v1827, 4
    %v1829 = vadd.f32 %v1827, %v1828
    %v1830 = vrot.slane %v1829, 2
    %v1831 = vadd.f32 %v1829, %v1830
    %v1832 = vrot.slane %v1831, 1
    %v1833 = vadd.f32 %v1831, %v1832
    %v1834 = vrcp.pop 2.0
    %v1835 = vmul.f32 %v1833, %v1834
    %v1836 = vsub.f32 %v1821, %v1835
    %v1837 = vmul.f32 %v1836, %v1836
    %v1838 = vsel %vm1826, %v1837, 0.0
    %v1839 = vrot.slane %v1838, 4
    %v1840 = vadd.f32 %v1838, %v1839
    %v1841 = vrot.slane %v1840, 2
    %v1842 = vadd.f32 %v1840, %v1841
    %v1843 = vrot.slane %v1842, 1
    %v1844 = vadd.f32 %v1842, %v1843
    %v1845 = vmul.f32 %v1844, %v1834
    %v1846 = vadd.f32 %v1845, 1e-05
    %v1847 = vrsqrt.pop %v1846
    %v1848 = vmul.f32 %v1836, %v1847
    %v1849 = vlaneseq
    %v1850 = vshrl.u32 %v1849, 7
    %v1851 = vsub.s32 0, %v1850
    %v1852 = vrot.slane %v1824, %v1851
    %v1853 = vmul.f32 %v1848, %v1852
    %v1854 = vlaneseq
    %v1855 = vshrl.u32 %v1854, 7
    %v1856 = vsub.s32 0, %v1855
    %v1857 = vrot.slane %v1825, %v1856
    %v1858 = vadd.f32 %v1853, %v1857
    %v1859 = vmax.f32 %v1858, 0.0
    %v1860 = vld [vmem:[#allocation5 + $0xb8] sm:$0xff]
    %v1861 = vld [vmem:[#allocation5 + $0xc0] sm:$0xff]
    %v1862 = vld [vmem:[#allocation5 + $0xc8] sm:$0xff]
    %v1863 = vld [vmem:[#allocation5 + $0xd0] sm:$0x3f]
    %v1864 = vld [vmem:[#allocation7 + $0x4] sm:$0x1]
    %v1865 = vlaneseq
    %v1866 = vshrl.u32 %v1865, 7
    %v1867 = vsub.s32 0, %v1866
    %v1868 = vrot.slane %v1864, %v1867
    %vm1869 = vcmask 244736
    %v1871 = vsel %vm1869, %v1859, 0
    %vm1873 = vcmask 1045504
    %v1875 = vsel %vm1873, %v1863, 0
    %1877 = vmatprep.subr.mxu0 0.0
    %1878 = vmatpush1.msra.mxu0 0.0
    %1879 = vmatprep.subr.mxu0 0.0
    %1880 = vmatpush1.msra.mxu0 0.0
    %1881 = vmatprep.subr.mxu0 0.0
    %1882 = vmatpush1.msra.mxu0 0.0
    %1883 = vmatprep.subr.mxu0 0.0
    %1884 = vmatpush1.msra.mxu0 0.0
    %1885 = vmatprep.subr.mxu0 0.0
    %1886 = vmatpush1.msra.mxu0 0.0
    %1887 = vmatprep.subr.mxu0 0.0
    %1888 = vmatpush1.msra.mxu0 0.0
    %1889 = vmatprep.subr.mxu0 0.0
    %1890 = vmatpush1.msra.mxu0 0.0
    %1891 = vmatprep.subr.mxu0 0.0
    %1892 = vmatpush1.msra.mxu0 0.0
    %1893 = vmatprep.subr.mxu0 0.0
    %1894 = vmatpush1.msra.mxu0 0.0
    %1895 = vmatprep.subr.mxu0 0.0
    %1896 = vmatpush1.msra.mxu0 0.0
    %1897 = vmatprep.subr.mxu0 0.0
    %1898 = vmatpush1.msra.mxu0 0.0
    %1899 = vmatprep.subr.mxu0 0.0
    %1900 = vmatpush1.msra.mxu0 0.0
    %1901 = vmatprep.subr.mxu0 0.0
    %1902 = vmatpush1.msra.mxu0 %v1875
    %1903 = vmatprep.subr.mxu0 0.0
    %1904 = vmatpush1.msra.mxu0 %v1862
    %1905 = vmatprep.subr.mxu0 0.0
    %1906 = vmatpush1.msra.mxu0 %v1861
    %1907 = vmatprep.subr.mxu0 0.0
    %1908 = vmatpush1.msra.mxu0 %v1860
    %1909 = vmatprep.subr.mxu0 0.0
    %1910 = vmatpush2.msra.mxu0 0.0
    %1911 = vmatprep.subr.mxu0 0.0
    %1912 = vmatpush2.msra.mxu0 0.0
    %1913 = vmatprep.subr.mxu0 0.0
    %1914 = vmatpush2.msra.mxu0 0.0
    %1915 = vmatprep.subr.mxu0 0.0
    %1916 = vmatpush2.msra.mxu0 0.0
    %1917 = vmatprep.subr.mxu0 0.0
    %1918 = vmatpush2.msra.mxu0 0.0
    %1919 = vmatprep.subr.mxu0 0.0
    %1920 = vmatpush2.msra.mxu0 0.0
    %1921 = vmatprep.subr.mxu0 0.0
    %1922 = vmatpush2.msra.mxu0 0.0
    %1923 = vmatprep.subr.mxu0 0.0
    %1924 = vmatpush2.msra.mxu0 0.0
    %1925 = vmatprep.subr.mxu0 0.0
    %1926 = vmatpush2.msra.mxu0 0.0
    %1927 = vmatprep.subr.mxu0 0.0
    %1928 = vmatpush2.msra.mxu0 0.0
    %1929 = vmatprep.subr.mxu0 0.0
    %1930 = vmatpush2.msra.mxu0 0.0
    %1931 = vmatprep.subr.mxu0 0.0
    %1932 = vmatpush2.msra.mxu0 0.0
    %1933 = vmatprep.subr.mxu0 0.0
    %1934 = vmatpush2.msra.mxu0 0.0
    %1935 = vmatprep.subr.mxu0 0.0
    %1936 = vmatpush2.msra.mxu0 0.0
    %1937 = vmatprep.subr.mxu0 0.0
    %1938 = vmatpush2.msra.mxu0 0.0
    %1939 = vmatprep.subr.mxu0 0.0
    %1940 = vmatpush2.msra.mxu0 0.0
    %1941 = vmatprep.mubr.f32.mxu0 0.0
    %1942 = vmatmul.mubr.f32.gmra.mxu0 %v1871
    %v1943 = vpop.f32.mrf.mxu0
    %v1944 = vadd.f32 %v1868, %v1943
    %v1945 = vpop.f32.mrf.mxu0
    %1946 = vdwg.mxu0
    %v1947 = vld [vmem:[#allocation7 + $0x5] sm:$0x1]
    %v1948 = vld [vmem:[#allocation7 + $0x6] sm:$0x1]
    %vm1949 = vcmask 123904
    %v1950 = vsel %vm1949, %v1944, 0.0
    %v1951 = vrot.slane %v1950, 4
    %v1952 = vadd.f32 %v1950, %v1951
    %v1953 = vrot.slane %v1952, 2
    %v1954 = vadd.f32 %v1952, %v1953
    %v1955 = vrot.slane %v1954, 1
    %v1956 = vadd.f32 %v1954, %v1955
    %v1957 = vmul.f32 %v1956, %v1834
    %v1958 = vsub.f32 %v1944, %v1957
    %v1959 = vmul.f32 %v1958, %v1958
    %v1960 = vsel %vm1949, %v1959, 0.0
    %v1961 = vrot.slane %v1960, 4
    %v1962 = vadd.f32 %v1960, %v1961
    %v1963 = vrot.slane %v1962, 2
    %v1964 = vadd.f32 %v1962, %v1963
    %v1965 = vrot.slane %v1964, 1
    %v1966 = vadd.f32 %v1964, %v1965
    %v1967 = vmul.f32 %v1966, %v1834
    %v1968 = vadd.f32 %v1967, 1e-05
    %v1969 = vrsqrt.pop %v1968
    %v1970 = vmul.f32 %v1958, %v1969
    %v1971 = vlaneseq
    %v1972 = vshrl.u32 %v1971, 7
    %v1973 = vsub.s32 0, %v1972
    %v1974 = vrot.slane %v1947, %v1973
    %v1975 = vmul.f32 %v1970, %v1974
    %v1976 = vlaneseq
    %v1977 = vshrl.u32 %v1976, 7
    %v1978 = vsub.s32 0, %v1977
    %v1979 = vrot.slane %v1948, %v1978
    %v1980 = vadd.f32 %v1975, %v1979
    %v1981 = vmax.f32 %v1980, 0.0
    %v1982 = vld [vmem:[#allocation5 + $0xd8] sm:$0xff]
    %v1983 = vld [vmem:[#allocation5 + $0xe0] sm:$0xff]
    %v1984 = vld [vmem:[#allocation7 + $0x7] sm:$0x1]
    %v1985 = vlaneseq
    %v1986 = vshrl.u32 %v1985, 7
    %v1987 = vsub.s32 0, %v1986
    %v1988 = vrot.slane %v1984, %v1987
    %v1990 = vsel %vm557, %v1981, 0
    %1992 = vmatprep.subr.mxu0 0.0
    %1993 = vmatpush1.msra.mxu0 0.0
    %1994 = vmatprep.subr.mxu0 0.0
    %1995 = vmatpush1.msra.mxu0 0.0
    %1996 = vmatprep.subr.mxu0 0.0
    %1997 = vmatpush1.msra.mxu0 0.0
    %1998 = vmatprep.subr.mxu0 0.0
    %1999 = vmatpush1.msra.mxu0 0.0
    %2000 = vmatprep.subr.mxu0 0.0
    %2001 = vmatpush1.msra.mxu0 0.0
    %2002 = vmatprep.subr.mxu0 0.0
    %2003 = vmatpush1.msra.mxu0 0.0
    %2004 = vmatprep.subr.mxu0 0.0
    %2005 = vmatpush1.msra.mxu0 0.0
    %2006 = vmatprep.subr.mxu0 0.0
    %2007 = vmatpush1.msra.mxu0 0.0
    %2008 = vmatprep.subr.mxu0 0.0
    %2009 = vmatpush1.msra.mxu0 0.0
    %2010 = vmatprep.subr.mxu0 0.0
    %2011 = vmatpush1.msra.mxu0 0.0
    %2012 = vmatprep.subr.mxu0 0.0
    %2013 = vmatpush1.msra.mxu0 0.0
    %2014 = vmatprep.subr.mxu0 0.0
    %2015 = vmatpush1.msra.mxu0 0.0
    %2016 = vmatprep.subr.mxu0 0.0
    %2017 = vmatpush1.msra.mxu0 0.0
    %2018 = vmatprep.subr.mxu0 0.0
    %2019 = vmatpush1.msra.mxu0 0.0
    %2020 = vmatprep.subr.mxu0 0.0
    %2021 = vmatpush1.msra.mxu0 %v1983
    %2022 = vmatprep.subr.mxu0 0.0
    %2023 = vmatpush1.msra.mxu0 %v1982
    %2024 = vmatprep.subr.mxu0 0.0
    %2025 = vmatpush2.msra.mxu0 0.0
    %2026 = vmatprep.subr.mxu0 0.0
    %2027 = vmatpush2.msra.mxu0 0.0
    %2028 = vmatprep.subr.mxu0 0.0
    %2029 = vmatpush2.msra.mxu0 0.0
    %2030 = vmatprep.subr.mxu0 0.0
    %2031 = vmatpush2.msra.mxu0 0.0
    %2032 = vmatprep.subr.mxu0 0.0
    %2033 = vmatpush2.msra.mxu0 0.0
    %2034 = vmatprep.subr.mxu0 0.0
    %2035 = vmatpush2.msra.mxu0 0.0
    %2036 = vmatprep.subr.mxu0 0.0
    %2037 = vmatpush2.msra.mxu0 0.0
    %2038 = vmatprep.subr.mxu0 0.0
    %2039 = vmatpush2.msra.mxu0 0.0
    %2040 = vmatprep.subr.mxu0 0.0
    %2041 = vmatpush2.msra.mxu0 0.0
    %2042 = vmatprep.subr.mxu0 0.0
    %2043 = vmatpush2.msra.mxu0 0.0
    %2044 = vmatprep.subr.mxu0 0.0
    %2045 = vmatpush2.msra.mxu0 0.0
    %2046 = vmatprep.subr.mxu0 0.0
    %2047 = vmatpush2.msra.mxu0 0.0
    %2048 = vmatprep.subr.mxu0 0.0
    %2049 = vmatpush2.msra.mxu0 0.0
    %2050 = vmatprep.subr.mxu0 0.0
    %2051 = vmatpush2.msra.mxu0 0.0
    %2052 = vmatprep.subr.mxu0 0.0
    %2053 = vmatpush2.msra.mxu0 0.0
    %2054 = vmatprep.subr.mxu0 0.0
    %2055 = vmatpush2.msra.mxu0 0.0
    %2056 = vmatprep.mubr.f32.mxu0 0.0
    %2057 = vmatmul.mubr.f32.gmra.mxu0 %v1990
    %v2058 = vpop.f32.mrf.mxu0
    %v2059 = vadd.f32 %v1988, %v2058
    %v2060 = vpop.f32.mrf.mxu0
    %2061 = vdwg.mxu0
    %vm2062 = vcmask 25600
    %v2063 = vsel %vm2062, %v2059, -inf
    %2064 = vmax.xlane.f32.xlu0 %v2063
    %v2065 = vpop.xlane.xlu0 %2064
    %v2066 = vsub.f32 %v2059, %v2065
    %v2067 = vmul.f32 %v2066, 1.442695
    %v2068 = vpow.pop %v2067
    %v2069 = vsel %vm2062, %v2068, 0.0
    %2070 = vadd.xlane.f32.xlu0 %v2069
    %v2071 = vpop.xlane.xlu0 %2070
    %v2072 = vrcp.pop %v2071
    %v2073 = vmul.f32 %v2068, %v2072
    %2074 = vst.msk [vmem:[#allocation8] sm:$0x3] %vm2062, %v2073
    // Predicated region
    $region26: #{tpu_custom_call.1} parent=1 // pred_check
      _
    $region27: #{tpu_custom_call.1} parent=1 // pred_check_branch
      %2076 = sbr.rel (0) target = $region29
    $region28: #{tpu_custom_call.1} parent=1 // pred_region
      %s2078 = ssub.s32 32, 32
      %2079 = vsyncadd [#allocation4], %s2078
      %s2081 = sshll.u32 [#allocation8], 4
      %s2082 = int_to_ptr.vmem [resolvable:$true] %s2081
      %2084 = dma.vmem_to_hbm [thread:$0]  %s2082, 32, %s3, [#allocation4]
    $region29: #{tpu_custom_call.1} parent=1 // pred_fallthru
      _
    // Predicated region
    $region30: #{tpu_custom_call.1} parent=1 // pred_check
      _
    $region31: #{tpu_custom_call.1} parent=1 // pred_check_branch
      %2086 = sbr.rel (0) target = $region33
    $region32: #{tpu_custom_call.1} parent=1 // pred_region
      %2087 = dma.done [#allocation4], 32
    $region33: #{tpu_custom_call.1} parent=1 // pred_fallthru
      _
    %2088 = vsyncpa [#allocation3], 1
    %2089 = vsyncpa [#allocation6], 1
    %2090 = vsyncpa [#allocation4], 1

</llo_original>
